<compile_context>
chip_gen: v5e
topology: v5e:2x2
jax: 0.10.0
libtpu: 0.0.40
codegen_flags: <defaults>
</compile_context>

<pallas_src>
import math
import numpy as np
import jax
import jax.numpy as jnp
from jax.experimental import pallas as pl
from jax.experimental.pallas import tpu as pltpu


# ---------------------------------------------------------------------------
# Fused Pallas kernel (grid over step-blocks; weights VMEM-resident across it)
# ---------------------------------------------------------------------------
def gcn_fused_kernel(x_ref, glove_ref, a_ref,
                     wr_ref, br_ref, ww_ref, bw_ref,
                     w1_ref, b1_ref,
                     w2_ref, b2_ref,
                     w3_ref, b3_ref,
                     wm_ref, bm_ref,
                     out_ref,
                     aw1b_scr, abd_scr, h1_scr):
    f32 = jnp.float32
    bf16 = jnp.bfloat16
    TB = x_ref.shape[0]              # steps handled by this grid block
    n = a_ref.shape[0]
    E = wr_ref.shape[1]

    a = a_ref[...]                   # (n, n) f32, VMEM-resident for all layers
    a_bf = a.astype(bf16)            # MXU operand

    # --- step-invariant precompute: runs once (grid step 0), reused afterwards.
    #     Requires dimension_semantics=("arbitrary",): sequential grid so step 0
    #     fills the scratches before any later step reads them.
    @pl.when(pl.program_id(0) == 0)
    def _():
        word_embed = (jnp.dot(glove_ref[...].astype(bf16), ww_ref[...],
                              preferred_element_type=f32) + bw_ref[...])       # (n, E)
        # gc1 word half: W1 sliced in-kernel (static, sublane-aligned view).
        w_part = jnp.dot(word_embed.astype(bf16), w1_ref[E:, :],
                         preferred_element_type=f32)                           # (n, H)
        aw1b_scr[...] = jnp.dot(a_bf, w_part.astype(bf16),
                                preferred_element_type=f32) + b1_ref[...]      # (n, H)
        # Block-diagonal A: folds the TB per-step A @ S matmuls of gc2 into ONE dot.
        abd_scr[...] = jnp.zeros_like(abd_scr)
        for b in range(TB):
            abd_scr[b * n:(b + 1) * n, b * n:(b + 1) * n] = a

    a_rowsum = jnp.sum(a, axis=1, keepdims=True)                               # (n, 1)

    # --- gcn_embed resnet half + gc1 (concat eliminated: split W1 + rowsum id) --
    resnet_embed = (jnp.dot(x_ref[...].astype(bf16), wr_ref[...],
                            preferred_element_type=f32) + br_ref[...])         # (TB, E)
    r_part = jnp.dot(resnet_embed.astype(bf16), w1_ref[:E, :],
                     preferred_element_type=f32)                               # (TB, H)
    aw1b = aw1b_scr[...]
    for b in range(TB):   # static & tiny: each block lands in an aligned scratch slice
        h1_scr[b * n:(b + 1) * n, :] = jnp.maximum(
            a_rowsum * r_part[b:b + 1, :] + aw1b, 0.0)
    h1_flat = h1_scr[...]                                                      # (TB*n, H) f32

    # --- gc2: support with steps folded into MXU M; aggregation via block-diag A --
    s2 = jnp.dot(h1_flat.astype(bf16), w2_ref[...],
                 preferred_element_type=f32)                                   # (TB*n, H)
    h2 = jnp.maximum(
        jnp.dot(abd_scr[...].astype(bf16), s2.astype(bf16),
                preferred_element_type=f32) + b2_ref[...], 0.0)                # (TB*n, H)

    # --- gc3: no N=1 MXU matmul (VPU broadcast-mul + lane reduce); the TB
    #     per-step (n,1) aggregations are stacked into one (n,n)@(n,TB) dot. ---
    s3_col = jnp.sum(h2 * w3_ref[...], axis=-1, keepdims=True)                 # (TB*n, 1)
    s3_stack = jnp.concatenate(
        [s3_col[b * n:(b + 1) * n, :] for b in range(TB)], axis=1)             # (n, TB)
    b3 = b3_ref[0, 0]                                                          # SMEM scalar
    h3 = jnp.maximum(jnp.dot(a_bf, s3_stack.astype(bf16),
                             preferred_element_type=f32) + b3, 0.0)            # (n, TB)

    # --- final n->M mapping fused; one dense (TB, M) store ---------------------
    wm = wm_ref[...].astype(f32)                                               # (n, M)
    bm = bm_ref[...]                                                           # (1, M)
    rows = [jnp.sum(h3[:, b:b + 1] * wm, axis=0, keepdims=True) + bm
            for b in range(TB)]
    out_ref[...] = jnp.concatenate(rows, axis=0)                               # (TB, M)


# ---------------------------------------------------------------------------
# Wrapper
# ---------------------------------------------------------------------------
def gcn_forward(x, all_glove, A, p, *, steps_per_block=None):
    B = x.shape[0]
    n, gd = all_glove.shape
    rd, E = p["w_resnet"].shape
    H = p["w_gc2"].shape[0]
    M = p["w_map"].shape[1]

    TB = steps_per_block or min(B, 8)
    assert B % TB == 0, "pad n_steps to a multiple of steps_per_block"
    assert n % 8 == 0 and E % 8 == 0, "toy sizes chosen sublane-aligned"
    grid = (B // TB,)

    bf16 = jnp.bfloat16
    f32 = jnp.float32
    # bf16 MXU weights (cast once here; in a real deployment store them bf16),
    # f32 biases / A / activations; f32 accumulation & elementwise in-kernel.
    args = (
        x.astype(f32), all_glove.astype(f32), A.astype(f32),
        p["w_resnet"].astype(bf16), p["b_resnet"].reshape(1, E).astype(f32),
        p["w_word"].astype(bf16),   p["b_word"].reshape(1, E).astype(f32),
        p["w_gc1"].astype(bf16),    p["b_gc1"].reshape(1, H).astype(f32),   # whole W1
        p["w_gc2"].astype(bf16),    p["b_gc2"].reshape(1, H).astype(f32),
        p["w_gc3"].reshape(1, H).astype(f32),     # used on the VPU only -> keep f32
        p["b_gc3"].reshape(1, 1).astype(f32),
        p["w_map"].astype(bf16),    p["b_map"].reshape(1, M).astype(f32),
    )

    vmem = pltpu.MemorySpace.VMEM
    smem = pltpu.MemorySpace.SMEM

    def resident(shape):
        # Whole array, same block at every grid step -> DMA'd once, VMEM-resident.
        return pl.BlockSpec(shape, lambda *_: (0,) * len(shape), memory_space=vmem)

    in_specs = [
        pl.BlockSpec((TB, rd), lambda i: (i, 0), memory_space=vmem),  # x: per-step block
        resident((n, gd)),                 # all_glove
        resident((n, n)),                  # A
        resident((rd, E)), resident((1, E)),       # resnet linear
        resident((gd, E)), resident((1, E)),       # word linear
        resident((2 * E, H)), resident((1, H)),    # gc1 (whole W1)
        resident((H, H)), resident((1, H)),        # gc2
        resident((1, H)),                          # gc3 weight as a row (VPU)
        pl.BlockSpec(memory_space=smem),           # gc3 scalar bias
        resident((n, M)), resident((1, M)),        # mapping
    ]
    out_specs = pl.BlockSpec((TB, M), lambda i: (i, 0), memory_space=vmem)

    flops = 2 * (B * rd * E + n * gd * E
                 + B * E * H + n * E * H + n * n * H
                 + B * n * H * H + B * TB * n * n * H
                 + B * n * H + B * n * n + B * n * M)
    bytes_accessed = (sum(arr.size * arr.dtype.itemsize for arr in args)
                      + B * M * 4)

    return pl.pallas_call(
        gcn_fused_kernel,
        out_shape=jax.ShapeDtypeStruct((B, M), f32),
        grid=grid,
        in_specs=in_specs,
        out_specs=out_specs,
        scratch_shapes=[
            pltpu.VMEM((n, H), f32),              # aw1b: batch-invariant gc1 word half
            pltpu.VMEM((TB * n, TB * n), f32),    # block-diagonal A
            pltpu.VMEM((TB * n, H), f32),         # gc1 activations, flat (steps x nodes)
        ],
        compiler_params=pltpu.CompilerParams(
            # Sequential grid: step 0 fills scratches; weights stay resident.
            # Do NOT megacore-shard while the kernel is weight-streaming bound.
            dimension_semantics=("arbitrary",),
            # Sized for real-scale bf16 weights + double buffers + scratch,
            # above v5e's 16 MiB scoped default, under v7x's 64 MiB physical.
            vmem_limit_bytes=48 * 1024 * 1024,
        ),
        cost_estimate=pl.CostEstimate(flops=flops, transcendentals=0,
                                      bytes_accessed=bytes_accessed),
    )(*args)


# ---------------------------------------------------------------------------
# Pure-JAX reference (mirrors the PyTorch module literally, full f32)
# ---------------------------------------------------------------------------
def gcn_reference(x, all_glove, A, p):
    B = x.shape[0]
    n = all_glove.shape[0]
    resnet_embed = x @ p["w_resnet"] + p["b_resnet"]
    word_embed = all_glove @ p["w_word"] + p["b_word"]
    x_emb = jnp.concatenate(
        [jnp.broadcast_to(resnet_embed[:, None, :], (B, n, resnet_embed.shape[1])),
         jnp.broadcast_to(word_embed[None, :, :], (B, n, word_embed.shape[1]))],
        axis=2)

    def gc(h, w, b):
        support = jnp.einsum("bnf,fo->bno", h, w)
        return jax.nn.relu(jnp.einsum("ij,bjo->bio", A, support) + b)

    h = gc(x_emb, p["w_gc1"], p["b_gc1"])
    h = gc(h, p["w_gc2"], p["b_gc2"])
    h = gc(h, p["w_gc3"], p["b_gc3"])
    h = h[..., 0]
    return h @ p["w_map"] + p["b_map"]


# ---------------------------------------------------------------------------
# Synthetic, deterministic setup (replaces the module's file loads)
# ---------------------------------------------------------------------------
def normalize_adj_np(adj):
    # D^{-1/2} A^T D^{-1/2}   (dense numpy version of the scipy reference)
    rowsum = adj.sum(axis=1)
    d_inv_sqrt = np.power(rowsum, -0.5, where=rowsum > 0, out=np.zeros_like(rowsum))
    d_inv_sqrt[np.isinf(d_inv_sqrt)] = 0.0
    d = np.diag(d_inv_sqrt)
    return (adj @ d).T @ d


def init_params(key, n, glove_dim, resnet_dim, embed, nhid, map_out):
    def uniform(key, shape, stdv):
        return jax.random.uniform(key, shape, jnp.float32, -stdv, stdv)

    ks = jax.random.split(key, 12)
    p = {}
    # nn.Linear style init (stdv = 1/sqrt(fan_in)); stored as (in, out)
    p["w_resnet"] = uniform(ks[0], (resnet_dim, embed), 1.0 / math.sqrt(resnet_dim))
    p["b_resnet"] = uniform(ks[1], (embed,), 1.0 / math.sqrt(resnet_dim))
    p["w_word"] = uniform(ks[2], (glove_dim, embed), 1.0 / math.sqrt(glove_dim))
    p["b_word"] = uniform(ks[3], (embed,), 1.0 / math.sqrt(glove_dim))
    # GraphConvolution init (stdv = 1/sqrt(out_features))
    p["w_gc1"] = uniform(ks[4], (2 * embed, nhid), 1.0 / math.sqrt(nhid))
    p["b_gc1"] = uniform(ks[5], (nhid,), 1.0 / math.sqrt(nhid))
    p["w_gc2"] = uniform(ks[6], (nhid, nhid), 1.0 / math.sqrt(nhid))
    p["b_gc2"] = uniform(ks[7], (nhid,), 1.0 / math.sqrt(nhid))
    p["w_gc3"] = uniform(ks[8], (nhid, 1), 1.0)
    p["b_gc3"] = uniform(ks[9], (1,), 1.0)
    p["w_map"] = uniform(ks[10], (n, map_out), 1.0 / math.sqrt(n))
    p["b_map"] = uniform(ks[11], (map_out,), 1.0 / math.sqrt(n))
    return p


if __name__ == "__main__":
    # Small synthetic shapes consistent with the module structure.
    B = 16           # n_steps batched per call (amortizes the weight DMA)
    TB = 8           # steps per grid block (grid = (2,), weights resident across it)
    n = 16           # number of objects (graph nodes)
    glove_dim = 32   # stands in for 300
    resnet_dim = 64  # stands in for 1000
    embed = 64       # stands in for 512
    nhid = 128       # stands in for 1024
    map_out = 64     # stands in for 512

    key = jax.random.PRNGKey(0)
    k_x, k_glove, k_adj, k_params = jax.random.split(key, 4)

    x = jax.random.normal(k_x, (B, resnet_dim), jnp.float32)          # resnet features
    all_glove = jax.random.normal(k_glove, (n, glove_dim), jnp.float32)

    # Synthetic symmetric adjacency with self-loops, normalized like normalize_adj().
    adj_raw = (np.asarray(jax.random.uniform(k_adj, (n, n))) > 0.6).astype(np.float32)
    adj_raw = np.maximum(adj_raw, adj_raw.T)
    np.fill_diagonal(adj_raw, 1.0)
    A = jnp.asarray(normalize_adj_np(adj_raw), dtype=jnp.float32)

    params = init_params(k_params, n, glove_dim, resnet_dim, embed, nhid, map_out)

    out = gcn_forward(x, all_glove, A, params, steps_per_block=TB)
    jax.block_until_ready(out)
    assert out.shape == (B, map_out), out.shape

    # Verify against the literal f32 math (tolerance loosened for bf16 MXU operands).
    ref = gcn_reference(x, all_glove, A, params)
    np.testing.assert_allclose(np.asarray(out), np.asarray(ref), rtol=2e-2, atol=2e-2)

    print("KERNEL_OK")
</pallas_src>

<mosaic_0001>
module attributes {stable_mosaic.version = 11 : i64} {
  func.func @gcn_fused_kernel(%arg0: i32, %arg1: memref<8x64xf32, #tpu.memory_space<vmem>>, %arg2: memref<16x32xf32, #tpu.memory_space<vmem>>, %arg3: memref<16x16xf32, #tpu.memory_space<vmem>>, %arg4: memref<64x64xbf16, #tpu.memory_space<vmem>>, %arg5: memref<1x64xf32, #tpu.memory_space<vmem>>, %arg6: memref<32x64xbf16, #tpu.memory_space<vmem>>, %arg7: memref<1x64xf32, #tpu.memory_space<vmem>>, %arg8: memref<128x128xbf16, #tpu.memory_space<vmem>>, %arg9: memref<1x128xf32, #tpu.memory_space<vmem>>, %arg10: memref<128x128xbf16, #tpu.memory_space<vmem>>, %arg11: memref<1x128xf32, #tpu.memory_space<vmem>>, %arg12: memref<1x128xf32, #tpu.memory_space<vmem>>, %arg13: memref<1x1xf32, #tpu.memory_space<smem>>, %arg14: memref<16x64xbf16, #tpu.memory_space<vmem>>, %arg15: memref<1x64xf32, #tpu.memory_space<vmem>>, %arg16: memref<8x64xf32, #tpu.memory_space<vmem>>, %arg17: memref<16x128xf32, #tpu.memory_space<vmem>>, %arg18: memref<128x128xf32, #tpu.memory_space<vmem>>, %arg19: memref<128x128xf32, #tpu.memory_space<vmem>>) attributes {dimension_semantics = [#tpu.dimension_semantics<arbitrary>], iteration_bounds = array<i64: 2>, scalar_prefetch = 0 : i64, scratch_operands = 3 : i64, tpu.core_type = #tpu.core_type<tc>, window_params = [{transform_indices = @transform_0, window_bounds = array<i64: 8, 64>}, {pipeline_mode = #tpu.pipeline_mode<synchronous>, transform_indices = @transform_1, window_bounds = array<i64: 16, 32>}, {pipeline_mode = #tpu.pipeline_mode<synchronous>, transform_indices = @transform_2, window_bounds = array<i64: 16, 16>}, {pipeline_mode = #tpu.pipeline_mode<synchronous>, transform_indices = @transform_3, window_bounds = array<i64: 64, 64>}, {pipeline_mode = #tpu.pipeline_mode<synchronous>, transform_indices = @transform_4, window_bounds = array<i64: 1, 64>}, {pipeline_mode = #tpu.pipeline_mode<synchronous>, transform_indices = @transform_5, window_bounds = array<i64: 32, 64>}, {pipeline_mode = #tpu.pipeline_mode<synchronous>, transform_indices = @transform_6, window_bounds = array<i64: 1, 64>}, {pipeline_mode = #tpu.pipeline_mode<synchronous>, transform_indices = @transform_7, window_bounds = array<i64: 128, 128>}, {pipeline_mode = #tpu.pipeline_mode<synchronous>, transform_indices = @transform_8, window_bounds = array<i64: 1, 128>}, {pipeline_mode = #tpu.pipeline_mode<synchronous>, transform_indices = @transform_9, window_bounds = array<i64: 128, 128>}, {pipeline_mode = #tpu.pipeline_mode<synchronous>, transform_indices = @transform_10, window_bounds = array<i64: 1, 128>}, {pipeline_mode = #tpu.pipeline_mode<synchronous>, transform_indices = @transform_11, window_bounds = array<i64: 1, 128>}, {transform_indices = @transform_12, window_bounds = array<i64: 1, 1>}, {pipeline_mode = #tpu.pipeline_mode<synchronous>, transform_indices = @transform_13, window_bounds = array<i64: 16, 64>}, {pipeline_mode = #tpu.pipeline_mode<synchronous>, transform_indices = @transform_14, window_bounds = array<i64: 1, 64>}, {transform_indices = @transform_15, window_bounds = array<i64: 8, 64>}]} {
    %c0 = arith.constant 0 : index
    %c0_0 = arith.constant 0 : index
    %0 = vector.load %arg3[%c0, %c0_0] : memref<16x16xf32, #tpu.memory_space<vmem>>, vector<16x16xf32>
    %1 = arith.truncf %0 : vector<16x16xf32> to vector<16x16xbf16>
    %c0_i32 = arith.constant 0 : i32
    %2 = arith.cmpi eq, %arg0, %c0_i32 : i32
    %3 = arith.extui %2 : i1 to i32
    %c0_i32_1 = arith.constant 0 : i32
    %4 = arith.cmpi ne, %3, %c0_i32_1 : i32
    scf.if %4 {
      %c0_63 = arith.constant 0 : index
      %c0_64 = arith.constant 0 : index
      %169 = vector.load %arg2[%c0_63, %c0_64] : memref<16x32xf32, #tpu.memory_space<vmem>>, vector<16x32xf32>
      %170 = arith.truncf %169 : vector<16x32xf32> to vector<16x32xbf16>
      %c0_65 = arith.constant 0 : index
      %c0_66 = arith.constant 0 : index
      %171 = vector.load %arg6[%c0_65, %c0_66] : memref<32x64xbf16, #tpu.memory_space<vmem>>, vector<32x64xbf16>
      %cst_67 = arith.constant dense<0.000000e+00> : vector<16x64xf32>
      %172 = tpu.matmul %170, %171, %cst_67 {dimension_numbers = #tpu.dot_dimension_numbers<[1], [0], [0], [1], [0, 0, 1, 1], [], []>} : vector<16x32xbf16>, vector<32x64xbf16>, vector<16x64xf32> -> vector<16x64xf32>
      %c0_68 = arith.constant 0 : index
      %c0_69 = arith.constant 0 : index
      %173 = vector.load %arg7[%c0_68, %c0_69] : memref<1x64xf32, #tpu.memory_space<vmem>>, vector<1x64xf32>
      %174 = vector.broadcast %173 : vector<1x64xf32> to vector<16x64xf32>
      %175 = arith.addf %172, %174 : vector<16x64xf32>
      %176 = arith.truncf %175 : vector<16x64xf32> to vector<16x64xbf16>
      %c64_70 = arith.constant 64 : index
      %c0_71 = arith.constant 0 : index
      %177 = vector.load %arg8[%c64_70, %c0_71] : memref<128x128xbf16, #tpu.memory_space<vmem>>, vector<64x128xbf16>
      %cst_72 = arith.constant dense<0.000000e+00> : vector<16x128xf32>
      %178 = tpu.matmul %176, %177, %cst_72 {dimension_numbers = #tpu.dot_dimension_numbers<[1], [0], [0], [1], [0, 0, 1, 1], [], []>} : vector<16x64xbf16>, vector<64x128xbf16>, vector<16x128xf32> -> vector<16x128xf32>
      %179 = arith.truncf %178 : vector<16x128xf32> to vector<16x128xbf16>
      %cst_73 = arith.constant dense<0.000000e+00> : vector<16x128xf32>
      %180 = tpu.matmul %1, %179, %cst_73 {dimension_numbers = #tpu.dot_dimension_numbers<[1], [0], [0], [1], [0, 0, 1, 1], [], []>} : vector<16x16xbf16>, vector<16x128xbf16>, vector<16x128xf32> -> vector<16x128xf32>
      %c0_74 = arith.constant 0 : index
      %c0_75 = arith.constant 0 : index
      %181 = vector.load %arg9[%c0_74, %c0_75] : memref<1x128xf32, #tpu.memory_space<vmem>>, vector<1x128xf32>
      %182 = vector.broadcast %181 : vector<1x128xf32> to vector<16x128xf32>
      %183 = arith.addf %180, %182 : vector<16x128xf32>
      %c0_76 = arith.constant 0 : index
      %c0_77 = arith.constant 0 : index
      %184 = vector.load %arg17[%c0_76, %c0_77] : memref<16x128xf32, #tpu.memory_space<vmem>>, vector<16x128xf32>
      tpu.vector_store %arg17[%c0_76, %c0_77], %183 {strides = array<i32>} : memref<16x128xf32, #tpu.memory_space<vmem>>, vector<16x128xf32>,
      %cst_78 = arith.constant 0.000000e+00 : f32
      %185 = vector.broadcast %cst_78 : f32 to vector<128x128xf32>
      %c0_79 = arith.constant 0 : index
      %c0_80 = arith.constant 0 : index
      %186 = vector.load %arg18[%c0_79, %c0_80] : memref<128x128xf32, #tpu.memory_space<vmem>>, vector<128x128xf32>
      tpu.vector_store %arg18[%c0_79, %c0_80], %185 {strides = array<i32>} : memref<128x128xf32, #tpu.memory_space<vmem>>, vector<128x128xf32>,
      %c0_81 = arith.constant 0 : index
      %c0_82 = arith.constant 0 : index
      %187 = vector.load %arg18[%c0_81, %c0_82] : memref<128x128xf32, #tpu.memory_space<vmem>>, vector<16x16xf32>
      tpu.vector_store %arg18[%c0_81, %c0_82], %0 {strides = array<i32>} : memref<128x128xf32, #tpu.memory_space<vmem>>, vector<16x16xf32>,
      %c16_83 = arith.constant 16 : index
      %c16_84 = arith.constant 16 : index
      %188 = vector.load %arg18[%c16_83, %c16_84] : memref<128x128xf32, #tpu.memory_space<vmem>>, vector<16x16xf32>
      tpu.vector_store %arg18[%c16_83, %c16_84], %0 {strides = array<i32>} : memref<128x128xf32, #tpu.memory_space<vmem>>, vector<16x16xf32>,
      %c32_85 = arith.constant 32 : index
      %c32_86 = arith.constant 32 : index
      %189 = vector.load %arg18[%c32_85, %c32_86] : memref<128x128xf32, #tpu.memory_space<vmem>>, vector<16x16xf32>
      tpu.vector_store %arg18[%c32_85, %c32_86], %0 {strides = array<i32>} : memref<128x128xf32, #tpu.memory_space<vmem>>, vector<16x16xf32>,
      %c48_87 = arith.constant 48 : index
      %c48_88 = arith.constant 48 : index
      %190 = vector.load %arg18[%c48_87, %c48_88] : memref<128x128xf32, #tpu.memory_space<vmem>>, vector<16x16xf32>
      tpu.vector_store %arg18[%c48_87, %c48_88], %0 {strides = array<i32>} : memref<128x128xf32, #tpu.memory_space<vmem>>, vector<16x16xf32>,
      %c64_89 = arith.constant 64 : index
      %c64_90 = arith.constant 64 : index
      %191 = vector.load %arg18[%c64_89, %c64_90] : memref<128x128xf32, #tpu.memory_space<vmem>>, vector<16x16xf32>
      tpu.vector_store %arg18[%c64_89, %c64_90], %0 {strides = array<i32>} : memref<128x128xf32, #tpu.memory_space<vmem>>, vector<16x16xf32>,
      %c80_91 = arith.constant 80 : index
      %c80_92 = arith.constant 80 : index
      %192 = vector.load %arg18[%c80_91, %c80_92] : memref<128x128xf32, #tpu.memory_space<vmem>>, vector<16x16xf32>
      tpu.vector_store %arg18[%c80_91, %c80_92], %0 {strides = array<i32>} : memref<128x128xf32, #tpu.memory_space<vmem>>, vector<16x16xf32>,
      %c96_93 = arith.constant 96 : index
      %c96_94 = arith.constant 96 : index
      %193 = vector.load %arg18[%c96_93, %c96_94] : memref<128x128xf32, #tpu.memory_space<vmem>>, vector<16x16xf32>
      tpu.vector_store %arg18[%c96_93, %c96_94], %0 {strides = array<i32>} : memref<128x128xf32, #tpu.memory_space<vmem>>, vector<16x16xf32>,
      %c112_95 = arith.constant 112 : index
      %c112_96 = arith.constant 112 : index
      %194 = vector.load %arg18[%c112_95, %c112_96] : memref<128x128xf32, #tpu.memory_space<vmem>>, vector<16x16xf32>
      tpu.vector_store %arg18[%c112_95, %c112_96], %0 {strides = array<i32>} : memref<128x128xf32, #tpu.memory_space<vmem>>, vector<16x16xf32>,
    } else {
    }
    %cst = arith.constant dense<0.000000e+00> : vector<16xf32>
    %5 = vector.multi_reduction <add>, %0, %cst [1] : vector<16x16xf32> to vector<16xf32>
    %6 = vector.shape_cast %5 : vector<16xf32> to vector<16x1xf32>
    %c0_2 = arith.constant 0 : index
    %c0_3 = arith.constant 0 : index
    %7 = vector.load %arg1[%c0_2, %c0_3] : memref<8x64xf32, #tpu.memory_space<vmem>>, vector<8x64xf32>
    %8 = arith.truncf %7 : vector<8x64xf32> to vector<8x64xbf16>
    %c0_4 = arith.constant 0 : index
    %c0_5 = arith.constant 0 : index
    %9 = vector.load %arg4[%c0_4, %c0_5] : memref<64x64xbf16, #tpu.memory_space<vmem>>, vector<64x64xbf16>
    %cst_6 = arith.constant dense<0.000000e+00> : vector<8x64xf32>
    %10 = tpu.matmul %8, %9, %cst_6 {dimension_numbers = #tpu.dot_dimension_numbers<[1], [0], [0], [1], [0, 0, 1, 1], [], []>} : vector<8x64xbf16>, vector<64x64xbf16>, vector<8x64xf32> -> vector<8x64xf32>
    %c0_7 = arith.constant 0 : index
    %c0_8 = arith.constant 0 : index
    %11 = vector.load %arg5[%c0_7, %c0_8] : memref<1x64xf32, #tpu.memory_space<vmem>>, vector<1x64xf32>
    %12 = vector.broadcast %11 : vector<1x64xf32> to vector<8x64xf32>
    %13 = arith.addf %10, %12 : vector<8x64xf32>
    %14 = arith.truncf %13 : vector<8x64xf32> to vector<8x64xbf16>
    %c0_9 = arith.constant 0 : index
    %c0_10 = arith.constant 0 : index
    %15 = vector.load %arg8[%c0_9, %c0_10] : memref<128x128xbf16, #tpu.memory_space<vmem>>, vector<64x128xbf16>
    %cst_11 = arith.constant dense<0.000000e+00> : vector<8x128xf32>
    %16 = tpu.matmul %14, %15, %cst_11 {dimension_numbers = #tpu.dot_dimension_numbers<[1], [0], [0], [1], [0, 0, 1, 1], [], []>} : vector<8x64xbf16>, vector<64x128xbf16>, vector<8x128xf32> -> vector<8x128xf32>
    %c0_12 = arith.constant 0 : index
    %c0_13 = arith.constant 0 : index
    %17 = vector.load %arg17[%c0_12, %c0_13] : memref<16x128xf32, #tpu.memory_space<vmem>>, vector<16x128xf32>
    %18 = vector.extract_strided_slice %16 {offsets = [0, 0], sizes = [1, 128], strides = [1, 1]} : vector<8x128xf32> to vector<1x128xf32>
    %19 = vector.broadcast %6 : vector<16x1xf32> to vector<16x128xf32>
    %20 = vector.broadcast %18 : vector<1x128xf32> to vector<16x128xf32>
    %21 = arith.mulf %19, %20 : vector<16x128xf32>
    %22 = arith.addf %21, %17 : vector<16x128xf32>
    %cst_14 = arith.constant 0.000000e+00 : f32
    %23 = vector.broadcast %cst_14 : f32 to vector<16x128xf32>
    %24 = arith.maximumf %22, %23 : vector<16x128xf32>
    %c0_15 = arith.constant 0 : index
    %c0_16 = arith.constant 0 : index
    %25 = vector.load %arg19[%c0_15, %c0_16] : memref<128x128xf32, #tpu.memory_space<vmem>>, vector<16x128xf32>
    tpu.vector_store %arg19[%c0_15, %c0_16], %24 {strides = array<i32>} : memref<128x128xf32, #tpu.memory_space<vmem>>, vector<16x128xf32>,
    %26 = vector.extract_strided_slice %16 {offsets = [1, 0], sizes = [1, 128], strides = [1, 1]} : vector<8x128xf32> to vector<1x128xf32>
    %27 = vector.broadcast %6 : vector<16x1xf32> to vector<16x128xf32>
    %28 = vector.broadcast %26 : vector<1x128xf32> to vector<16x128xf32>
    %29 = arith.mulf %27, %28 : vector<16x128xf32>
    %30 = arith.addf %29, %17 : vector<16x128xf32>
    %cst_17 = arith.constant 0.000000e+00 : f32
    %31 = vector.broadcast %cst_17 : f32 to vector<16x128xf32>
    %32 = arith.maximumf %30, %31 : vector<16x128xf32>
    %c16 = arith.constant 16 : index
    %c0_18 = arith.constant 0 : index
    %33 = vector.load %arg19[%c16, %c0_18] : memref<128x128xf32, #tpu.memory_space<vmem>>, vector<16x128xf32>
    tpu.vector_store %arg19[%c16, %c0_18], %32 {strides = array<i32>} : memref<128x128xf32, #tpu.memory_space<vmem>>, vector<16x128xf32>,
    %34 = vector.extract_strided_slice %16 {offsets = [2, 0], sizes = [1, 128], strides = [1, 1]} : vector<8x128xf32> to vector<1x128xf32>
    %35 = vector.broadcast %6 : vector<16x1xf32> to vector<16x128xf32>
    %36 = vector.broadcast %34 : vector<1x128xf32> to vector<16x128xf32>
    %37 = arith.mulf %35, %36 : vector<16x128xf32>
    %38 = arith.addf %37, %17 : vector<16x128xf32>
    %cst_19 = arith.constant 0.000000e+00 : f32
    %39 = vector.broadcast %cst_19 : f32 to vector<16x128xf32>
    %40 = arith.maximumf %38, %39 : vector<16x128xf32>
    %c32 = arith.constant 32 : index
    %c0_20 = arith.constant 0 : index
    %41 = vector.load %arg19[%c32, %c0_20] : memref<128x128xf32, #tpu.memory_space<vmem>>, vector<16x128xf32>
    tpu.vector_store %arg19[%c32, %c0_20], %40 {strides = array<i32>} : memref<128x128xf32, #tpu.memory_space<vmem>>, vector<16x128xf32>,
    %42 = vector.extract_strided_slice %16 {offsets = [3, 0], sizes = [1, 128], strides = [1, 1]} : vector<8x128xf32> to vector<1x128xf32>
    %43 = vector.broadcast %6 : vector<16x1xf32> to vector<16x128xf32>
    %44 = vector.broadcast %42 : vector<1x128xf32> to vector<16x128xf32>
    %45 = arith.mulf %43, %44 : vector<16x128xf32>
    %46 = arith.addf %45, %17 : vector<16x128xf32>
    %cst_21 = arith.constant 0.000000e+00 : f32
    %47 = vector.broadcast %cst_21 : f32 to vector<16x128xf32>
    %48 = arith.maximumf %46, %47 : vector<16x128xf32>
    %c48 = arith.constant 48 : index
    %c0_22 = arith.constant 0 : index
    %49 = vector.load %arg19[%c48, %c0_22] : memref<128x128xf32, #tpu.memory_space<vmem>>, vector<16x128xf32>
    tpu.vector_store %arg19[%c48, %c0_22], %48 {strides = array<i32>} : memref<128x128xf32, #tpu.memory_space<vmem>>, vector<16x128xf32>,
    %50 = vector.extract_strided_slice %16 {offsets = [4, 0], sizes = [1, 128], strides = [1, 1]} : vector<8x128xf32> to vector<1x128xf32>
    %51 = vector.broadcast %6 : vector<16x1xf32> to vector<16x128xf32>
    %52 = vector.broadcast %50 : vector<1x128xf32> to vector<16x128xf32>
    %53 = arith.mulf %51, %52 : vector<16x128xf32>
    %54 = arith.addf %53, %17 : vector<16x128xf32>
    %cst_23 = arith.constant 0.000000e+00 : f32
    %55 = vector.broadcast %cst_23 : f32 to vector<16x128xf32>
    %56 = arith.maximumf %54, %55 : vector<16x128xf32>
    %c64 = arith.constant 64 : index
    %c0_24 = arith.constant 0 : index
    %57 = vector.load %arg19[%c64, %c0_24] : memref<128x128xf32, #tpu.memory_space<vmem>>, vector<16x128xf32>
    tpu.vector_store %arg19[%c64, %c0_24], %56 {strides = array<i32>} : memref<128x128xf32, #tpu.memory_space<vmem>>, vector<16x128xf32>,
    %58 = vector.extract_strided_slice %16 {offsets = [5, 0], sizes = [1, 128], strides = [1, 1]} : vector<8x128xf32> to vector<1x128xf32>
    %59 = vector.broadcast %6 : vector<16x1xf32> to vector<16x128xf32>
    %60 = vector.broadcast %58 : vector<1x128xf32> to vector<16x128xf32>
    %61 = arith.mulf %59, %60 : vector<16x128xf32>
    %62 = arith.addf %61, %17 : vector<16x128xf32>
    %cst_25 = arith.constant 0.000000e+00 : f32
    %63 = vector.broadcast %cst_25 : f32 to vector<16x128xf32>
    %64 = arith.maximumf %62, %63 : vector<16x128xf32>
    %c80 = arith.constant 80 : index
    %c0_26 = arith.constant 0 : index
    %65 = vector.load %arg19[%c80, %c0_26] : memref<128x128xf32, #tpu.memory_space<vmem>>, vector<16x128xf32>
    tpu.vector_store %arg19[%c80, %c0_26], %64 {strides = array<i32>} : memref<128x128xf32, #tpu.memory_space<vmem>>, vector<16x128xf32>,
    %66 = vector.extract_strided_slice %16 {offsets = [6, 0], sizes = [1, 128], strides = [1, 1]} : vector<8x128xf32> to vector<1x128xf32>
    %67 = vector.broadcast %6 : vector<16x1xf32> to vector<16x128xf32>
    %68 = vector.broadcast %66 : vector<1x128xf32> to vector<16x128xf32>
    %69 = arith.mulf %67, %68 : vector<16x128xf32>
    %70 = arith.addf %69, %17 : vector<16x128xf32>
    %cst_27 = arith.constant 0.000000e+00 : f32
    %71 = vector.broadcast %cst_27 : f32 to vector<16x128xf32>
    %72 = arith.maximumf %70, %71 : vector<16x128xf32>
    %c96 = arith.constant 96 : index
    %c0_28 = arith.constant 0 : index
    %73 = vector.load %arg19[%c96, %c0_28] : memref<128x128xf32, #tpu.memory_space<vmem>>, vector<16x128xf32>
    tpu.vector_store %arg19[%c96, %c0_28], %72 {strides = array<i32>} : memref<128x128xf32, #tpu.memory_space<vmem>>, vector<16x128xf32>,
    %74 = vector.extract_strided_slice %16 {offsets = [7, 0], sizes = [1, 128], strides = [1, 1]} : vector<8x128xf32> to vector<1x128xf32>
    %75 = vector.broadcast %6 : vector<16x1xf32> to vector<16x128xf32>
    %76 = vector.broadcast %74 : vector<1x128xf32> to vector<16x128xf32>
    %77 = arith.mulf %75, %76 : vector<16x128xf32>
    %78 = arith.addf %77, %17 : vector<16x128xf32>
    %cst_29 = arith.constant 0.000000e+00 : f32
    %79 = vector.broadcast %cst_29 : f32 to vector<16x128xf32>
    %80 = arith.maximumf %78, %79 : vector<16x128xf32>
    %c112 = arith.constant 112 : index
    %c0_30 = arith.constant 0 : index
    %81 = vector.load %arg19[%c112, %c0_30] : memref<128x128xf32, #tpu.memory_space<vmem>>, vector<16x128xf32>
    tpu.vector_store %arg19[%c112, %c0_30], %80 {strides = array<i32>} : memref<128x128xf32, #tpu.memory_space<vmem>>, vector<16x128xf32>,
    %c0_31 = arith.constant 0 : index
    %c0_32 = arith.constant 0 : index
    %82 = vector.load %arg19[%c0_31, %c0_32] : memref<128x128xf32, #tpu.memory_space<vmem>>, vector<128x128xf32>
    %83 = arith.truncf %82 : vector<128x128xf32> to vector<128x128xbf16>
    %c0_33 = arith.constant 0 : index
    %c0_34 = arith.constant 0 : index
    %84 = vector.load %arg10[%c0_33, %c0_34] : memref<128x128xbf16, #tpu.memory_space<vmem>>, vector<128x128xbf16>
    %cst_35 = arith.constant dense<0.000000e+00> : vector<128x128xf32>
    %85 = tpu.matmul %83, %84, %cst_35 {dimension_numbers = #tpu.dot_dimension_numbers<[1], [0], [0], [1], [0, 0, 1, 1], [], []>} : vector<128x128xbf16>, vector<128x128xbf16>, vector<128x128xf32> -> vector<128x128xf32>
    %c0_36 = arith.constant 0 : index
    %c0_37 = arith.constant 0 : index
    %86 = vector.load %arg18[%c0_36, %c0_37] : memref<128x128xf32, #tpu.memory_space<vmem>>, vector<128x128xf32>
    %87 = arith.truncf %86 : vector<128x128xf32> to vector<128x128xbf16>
    %88 = arith.truncf %85 : vector<128x128xf32> to vector<128x128xbf16>
    %cst_38 = arith.constant dense<0.000000e+00> : vector<128x128xf32>
    %89 = tpu.matmul %87, %88, %cst_38 {dimension_numbers = #tpu.dot_dimension_numbers<[1], [0], [0], [1], [0, 0, 1, 1], [], []>} : vector<128x128xbf16>, vector<128x128xbf16>, vector<128x128xf32> -> vector<128x128xf32>
    %c0_39 = arith.constant 0 : index
    %c0_40 = arith.constant 0 : index
    %90 = vector.load %arg11[%c0_39, %c0_40] : memref<1x128xf32, #tpu.memory_space<vmem>>, vector<1x128xf32>
    %91 = vector.broadcast %90 : vector<1x128xf32> to vector<128x128xf32>
    %92 = arith.addf %89, %91 : vector<128x128xf32>
    %cst_41 = arith.constant 0.000000e+00 : f32
    %93 = vector.broadcast %cst_41 : f32 to vector<128x128xf32>
    %94 = arith.maximumf %92, %93 : vector<128x128xf32>
    %c0_42 = arith.constant 0 : index
    %c0_43 = arith.constant 0 : index
    %95 = vector.load %arg12[%c0_42, %c0_43] : memref<1x128xf32, #tpu.memory_space<vmem>>, vector<1x128xf32>
    %96 = vector.broadcast %95 : vector<1x128xf32> to vector<128x128xf32>
    %97 = arith.mulf %94, %96 : vector<128x128xf32>
    %cst_44 = arith.constant dense<0.000000e+00> : vector<128xf32>
    %98 = vector.multi_reduction <add>, %97, %cst_44 [1] : vector<128x128xf32> to vector<128xf32>
    %99 = vector.shape_cast %98 : vector<128xf32> to vector<128x1xf32>
    %100 = vector.extract_strided_slice %99 {offsets = [0, 0], sizes = [16, 1], strides = [1, 1]} : vector<128x1xf32> to vector<16x1xf32>
    %101 = vector.extract_strided_slice %99 {offsets = [16, 0], sizes = [16, 1], strides = [1, 1]} : vector<128x1xf32> to vector<16x1xf32>
    %102 = vector.extract_strided_slice %99 {offsets = [32, 0], sizes = [16, 1], strides = [1, 1]} : vector<128x1xf32> to vector<16x1xf32>
    %103 = vector.extract_strided_slice %99 {offsets = [48, 0], sizes = [16, 1], strides = [1, 1]} : vector<128x1xf32> to vector<16x1xf32>
    %104 = vector.extract_strided_slice %99 {offsets = [64, 0], sizes = [16, 1], strides = [1, 1]} : vector<128x1xf32> to vector<16x1xf32>
    %105 = vector.extract_strided_slice %99 {offsets = [80, 0], sizes = [16, 1], strides = [1, 1]} : vector<128x1xf32> to vector<16x1xf32>
    %106 = vector.extract_strided_slice %99 {offsets = [96, 0], sizes = [16, 1], strides = [1, 1]} : vector<128x1xf32> to vector<16x1xf32>
    %107 = vector.extract_strided_slice %99 {offsets = [112, 0], sizes = [16, 1], strides = [1, 1]} : vector<128x1xf32> to vector<16x1xf32>
    %108 = tpu.concatenate %100, %101, %102, %103, %104, %105, %106, %107 in 1 : vector<16x1xf32>, vector<16x1xf32>, vector<16x1xf32>, vector<16x1xf32>, vector<16x1xf32>, vector<16x1xf32>, vector<16x1xf32>, vector<16x1xf32> -> vector<16x8xf32>
    %c0_45 = arith.constant 0 : index
    %c0_46 = arith.constant 0 : index
    %109 = memref.load %arg13[%c0_45, %c0_46] : memref<1x1xf32, #tpu.memory_space<smem>>
    %110 = arith.truncf %108 : vector<16x8xf32> to vector<16x8xbf16>
    %cst_47 = arith.constant dense<0.000000e+00> : vector<16x8xf32>
    %111 = tpu.matmul %1, %110, %cst_47 {dimension_numbers = #tpu.dot_dimension_numbers<[1], [0], [0], [1], [0, 0, 1, 1], [], []>} : vector<16x16xbf16>, vector<16x8xbf16>, vector<16x8xf32> -> vector<16x8xf32>
    %112 = vector.broadcast %109 : f32 to vector<16x8xf32>
    %113 = arith.addf %111, %112 : vector<16x8xf32>
    %cst_48 = arith.constant 0.000000e+00 : f32
    %114 = vector.broadcast %cst_48 : f32 to vector<16x8xf32>
    %115 = arith.maximumf %113, %114 : vector<16x8xf32>
    %c0_49 = arith.constant 0 : index
    %c0_50 = arith.constant 0 : index
    %116 = vector.load %arg14[%c0_49, %c0_50] : memref<16x64xbf16, #tpu.memory_space<vmem>>, vector<16x64xbf16>
    %117 = arith.extf %116 : vector<16x64xbf16> to vector<16x64xf32>
    %c0_51 = arith.constant 0 : index
    %c0_52 = arith.constant 0 : index
    %118 = vector.load %arg15[%c0_51, %c0_52] : memref<1x64xf32, #tpu.memory_space<vmem>>, vector<1x64xf32>
    %119 = vector.extract_strided_slice %115 {offsets = [0, 0], sizes = [16, 1], strides = [1, 1]} : vector<16x8xf32> to vector<16x1xf32>
    %120 = vector.broadcast %119 : vector<16x1xf32> to vector<16x64xf32>
    %121 = arith.mulf %120, %117 : vector<16x64xf32>
    %cst_53 = arith.constant dense<0.000000e+00> : vector<64xf32>
    %122 = vector.multi_reduction <add>, %121, %cst_53 [0] : vector<16x64xf32> to vector<64xf32>
    %123 = vector.shape_cast %122 : vector<64xf32> to vector<1x64xf32>
    %124 = arith.addf %123, %118 : vector<1x64xf32>
    %125 = vector.extract_strided_slice %115 {offsets = [0, 1], sizes = [16, 1], strides = [1, 1]} : vector<16x8xf32> to vector<16x1xf32>
    %126 = vector.broadcast %125 : vector<16x1xf32> to vector<16x64xf32>
    %127 = arith.mulf %126, %117 : vector<16x64xf32>
    %cst_54 = arith.constant dense<0.000000e+00> : vector<64xf32>
    %128 = vector.multi_reduction <add>, %127, %cst_54 [0] : vector<16x64xf32> to vector<64xf32>
    %129 = vector.shape_cast %128 : vector<64xf32> to vector<1x64xf32>
    %130 = arith.addf %129, %118 : vector<1x64xf32>
    %131 = vector.extract_strided_slice %115 {offsets = [0, 2], sizes = [16, 1], strides = [1, 1]} : vector<16x8xf32> to vector<16x1xf32>
    %132 = vector.broadcast %131 : vector<16x1xf32> to vector<16x64xf32>
    %133 = arith.mulf %132, %117 : vector<16x64xf32>
    %cst_55 = arith.constant dense<0.000000e+00> : vector<64xf32>
    %134 = vector.multi_reduction <add>, %133, %cst_55 [0] : vector<16x64xf32> to vector<64xf32>
    %135 = vector.shape_cast %134 : vector<64xf32> to vector<1x64xf32>
    %136 = arith.addf %135, %118 : vector<1x64xf32>
    %137 = vector.extract_strided_slice %115 {offsets = [0, 3], sizes = [16, 1], strides = [1, 1]} : vector<16x8xf32> to vector<16x1xf32>
    %138 = vector.broadcast %137 : vector<16x1xf32> to vector<16x64xf32>
    %139 = arith.mulf %138, %117 : vector<16x64xf32>
    %cst_56 = arith.constant dense<0.000000e+00> : vector<64xf32>
    %140 = vector.multi_reduction <add>, %139, %cst_56 [0] : vector<16x64xf32> to vector<64xf32>
    %141 = vector.shape_cast %140 : vector<64xf32> to vector<1x64xf32>
    %142 = arith.addf %141, %118 : vector<1x64xf32>
    %143 = vector.extract_strided_slice %115 {offsets = [0, 4], sizes = [16, 1], strides = [1, 1]} : vector<16x8xf32> to vector<16x1xf32>
    %144 = vector.broadcast %143 : vector<16x1xf32> to vector<16x64xf32>
    %145 = arith.mulf %144, %117 : vector<16x64xf32>
    %cst_57 = arith.constant dense<0.000000e+00> : vector<64xf32>
    %146 = vector.multi_reduction <add>, %145, %cst_57 [0] : vector<16x64xf32> to vector<64xf32>
    %147 = vector.shape_cast %146 : vector<64xf32> to vector<1x64xf32>
    %148 = arith.addf %147, %118 : vector<1x64xf32>
    %149 = vector.extract_strided_slice %115 {offsets = [0, 5], sizes = [16, 1], strides = [1, 1]} : vector<16x8xf32> to vector<16x1xf32>
    %150 = vector.broadcast %149 : vector<16x1xf32> to vector<16x64xf32>
    %151 = arith.mulf %150, %117 : vector<16x64xf32>
    %cst_58 = arith.constant dense<0.000000e+00> : vector<64xf32>
    %152 = vector.multi_reduction <add>, %151, %cst_58 [0] : vector<16x64xf32> to vector<64xf32>
    %153 = vector.shape_cast %152 : vector<64xf32> to vector<1x64xf32>
    %154 = arith.addf %153, %118 : vector<1x64xf32>
    %155 = vector.extract_strided_slice %115 {offsets = [0, 6], sizes = [16, 1], strides = [1, 1]} : vector<16x8xf32> to vector<16x1xf32>
    %156 = vector.broadcast %155 : vector<16x1xf32> to vector<16x64xf32>
    %157 = arith.mulf %156, %117 : vector<16x64xf32>
    %cst_59 = arith.constant dense<0.000000e+00> : vector<64xf32>
    %158 = vector.multi_reduction <add>, %157, %cst_59 [0] : vector<16x64xf32> to vector<64xf32>
    %159 = vector.shape_cast %158 : vector<64xf32> to vector<1x64xf32>
    %160 = arith.addf %159, %118 : vector<1x64xf32>
    %161 = vector.extract_strided_slice %115 {offsets = [0, 7], sizes = [16, 1], strides = [1, 1]} : vector<16x8xf32> to vector<16x1xf32>
    %162 = vector.broadcast %161 : vector<16x1xf32> to vector<16x64xf32>
    %163 = arith.mulf %162, %117 : vector<16x64xf32>
    %cst_60 = arith.constant dense<0.000000e+00> : vector<64xf32>
    %164 = vector.multi_reduction <add>, %163, %cst_60 [0] : vector<16x64xf32> to vector<64xf32>
    %165 = vector.shape_cast %164 : vector<64xf32> to vector<1x64xf32>
    %166 = arith.addf %165, %118 : vector<1x64xf32>
    %167 = tpu.concatenate %124, %130, %136, %142, %148, %154, %160, %166 in 0 : vector<1x64xf32>, vector<1x64xf32>, vector<1x64xf32>, vector<1x64xf32>, vector<1x64xf32>, vector<1x64xf32>, vector<1x64xf32>, vector<1x64xf32> -> vector<8x64xf32>
    %c0_61 = arith.constant 0 : index
    %c0_62 = arith.constant 0 : index
    %168 = vector.load %arg16[%c0_61, %c0_62] : memref<8x64xf32, #tpu.memory_space<vmem>>, vector<8x64xf32>
    tpu.vector_store %arg16[%c0_61, %c0_62], %167 {strides = array<i32>} : memref<8x64xf32, #tpu.memory_space<vmem>>, vector<8x64xf32>,
    return
  }
  func.func @transform_0(%arg0: i32) -> (i32, i32) {
    %c0_i32 = arith.constant 0 : i32
    %c0_i32_0 = arith.constant 0 : i32
    return %arg0, %c0_i32 : i32, i32
  }
  func.func @transform_1(%arg0: i32) -> (i32, i32) {
    %c0_i32 = arith.constant 0 : i32
    %c0_i32_0 = arith.constant 0 : i32
    %c0_i32_1 = arith.constant 0 : i32
    return %c0_i32, %c0_i32_0 : i32, i32
  }
  func.func @transform_2(%arg0: i32) -> (i32, i32) {
    %c0_i32 = arith.constant 0 : i32
    %c0_i32_0 = arith.constant 0 : i32
    %c0_i32_1 = arith.constant 0 : i32
    return %c0_i32, %c0_i32_0 : i32, i32
  }
  func.func @transform_3(%arg0: i32) -> (i32, i32) {
    %c0_i32 = arith.constant 0 : i32
    %c0_i32_0 = arith.constant 0 : i32
    %c0_i32_1 = arith.constant 0 : i32
    return %c0_i32, %c0_i32_0 : i32, i32
  }
  func.func @transform_4(%arg0: i32) -> (i32, i32) {
    %c0_i32 = arith.constant 0 : i32
    %c0_i32_0 = arith.constant 0 : i32
    %c0_i32_1 = arith.constant 0 : i32
    return %c0_i32, %c0_i32_0 : i32, i32
  }
  func.func @transform_5(%arg0: i32) -> (i32, i32) {
    %c0_i32 = arith.constant 0 : i32
    %c0_i32_0 = arith.constant 0 : i32
    %c0_i32_1 = arith.constant 0 : i32
    return %c0_i32, %c0_i32_0 : i32, i32
  }
  func.func @transform_6(%arg0: i32) -> (i32, i32) {
    %c0_i32 = arith.constant 0 : i32
    %c0_i32_0 = arith.constant 0 : i32
    %c0_i32_1 = arith.constant 0 : i32
    return %c0_i32, %c0_i32_0 : i32, i32
  }
  func.func @transform_7(%arg0: i32) -> (i32, i32) {
    %c0_i32 = arith.constant 0 : i32
    %c0_i32_0 = arith.constant 0 : i32
    %c0_i32_1 = arith.constant 0 : i32
    return %c0_i32, %c0_i32_0 : i32, i32
  }
  func.func @transform_8(%arg0: i32) -> (i32, i32) {
    %c0_i32 = arith.constant 0 : i32
    %c0_i32_0 = arith.constant 0 : i32
    %c0_i32_1 = arith.constant 0 : i32
    return %c0_i32, %c0_i32_0 : i32, i32
  }
  func.func @transform_9(%arg0: i32) -> (i32, i32) {
    %c0_i32 = arith.constant 0 : i32
    %c0_i32_0 = arith.constant 0 : i32
    %c0_i32_1 = arith.constant 0 : i32
    return %c0_i32, %c0_i32_0 : i32, i32
  }
  func.func @transform_10(%arg0: i32) -> (i32, i32) {
    %c0_i32 = arith.constant 0 : i32
    %c0_i32_0 = arith.constant 0 : i32
    %c0_i32_1 = arith.constant 0 : i32
    return %c0_i32, %c0_i32_0 : i32, i32
  }
  func.func @transform_11(%arg0: i32) -> (i32, i32) {
    %c0_i32 = arith.constant 0 : i32
    %c0_i32_0 = arith.constant 0 : i32
    %c0_i32_1 = arith.constant 0 : i32
    return %c0_i32, %c0_i32_0 : i32, i32
  }
  func.func @transform_12(%arg0: i32) -> (i32, i32) {
    %c0_i32 = arith.constant 0 : i32
    %c0_i32_0 = arith.constant 0 : i32
    %c0_i32_1 = arith.constant 0 : i32
    return %c0_i32, %c0_i32_0 : i32, i32
  }
  func.func @transform_13(%arg0: i32) -> (i32, i32) {
    %c0_i32 = arith.constant 0 : i32
    %c0_i32_0 = arith.constant 0 : i32
    %c0_i32_1 = arith.constant 0 : i32
    return %c0_i32, %c0_i32_0 : i32, i32
  }
  func.func @transform_14(%arg0: i32) -> (i32, i32) {
    %c0_i32 = arith.constant 0 : i32
    %c0_i32_0 = arith.constant 0 : i32
    %c0_i32_1 = arith.constant 0 : i32
    return %c0_i32, %c0_i32_0 : i32, i32
  }
  func.func @transform_15(%arg0: i32) -> (i32, i32) {
    %c0_i32 = arith.constant 0 : i32
    %c0_i32_0 = arith.constant 0 : i32
    return %arg0, %c0_i32 : i32, i32
  }
}

</mosaic_0001>

<llo_original>
// kernel: tpu_custom_call.1
$region0: #{tpu_custom_call.1}
  #allocation0 [shape = 'u32[]', space=smem, size = 0x4, offset = 0x4, fixed_abs, tag = 'smem constant byte address 0x4 - core index']
  #allocation1 [shape = 'u32[72,128]{1,0:T(1,128)}', space=vmem, size = 0x9000, scoped, tag = 'internal scratch']
  #allocation2 [shape = 'f32[16,128]{1,0:T(8,128)}', space=vmem, size = 0x2000, scoped, tag = 'scratch operand']
  #allocation3 [shape = 'f32[128,128]{1,0:T(8,128)}', space=vmem, size = 0x10000, scoped, tag = 'scratch operand']
  #allocation4 [shape = 'f32[128,128]{1,0:T(8,128)}', space=vmem, size = 0x10000, scoped, tag = 'scratch operand']
  #allocation5 [shape = 'f32[1,1]{1,0:T(1,128)S(6)}', space=smem, size = 0x200, scoped, tag = 'scoped memory for tpu_custom_call.1']
  %s0 = inlined_call_operand.hbm [shape: f32[16,64], index: 0, kind: input, shape index: {}]
  %s1 = inlined_call_operand.hbm [shape: f32[16,32], index: 1, kind: input, shape index: {}]
  %s2 = inlined_call_operand.hbm [shape: f32[16,16], index: 2, kind: input, shape index: {}]
  %s3 = inlined_call_operand.hbm [shape: bf16[64,64], index: 3, kind: input, shape index: {}]
  %s4 = inlined_call_operand.vmem [shape: f32[1,64], index: 4, kind: input, shape index: {}]
  %s5 = inlined_call_operand.hbm [shape: bf16[32,64], index: 5, kind: input, shape index: {}]
  %s6 = inlined_call_operand.vmem [shape: f32[1,64], index: 6, kind: input, shape index: {}]
  %s7 = inlined_call_operand.hbm [shape: bf16[128,128], index: 7, kind: input, shape index: {}]
  %s8 = inlined_call_operand.vmem [shape: f32[1,128], index: 8, kind: input, shape index: {}]
  %s9 = inlined_call_operand.hbm [shape: bf16[128,128], index: 9, kind: input, shape index: {}]
  %s10 = inlined_call_operand.vmem [shape: f32[1,128], index: 10, kind: input, shape index: {}]
  %s11 = inlined_call_operand.vmem [shape: f32[1,128], index: 11, kind: input, shape index: {}]
  %s12 = inlined_call_operand.<no memory space> [shape: f32[1,1], index: 12, kind: input, shape index: {}]
  %s13 = inlined_call_operand.vmem [shape: bf16[16,64], index: 13, kind: input, shape index: {}]
  %s14 = inlined_call_operand.vmem [shape: f32[1,64], index: 14, kind: input, shape index: {}]
  %s15 = inlined_call_operand.hbm [shape: f32[16,64], index: 15, kind: output, shape index: {}]
  %s16 = sld [smem:[#allocation0]]
  $region125: #{tpu_custom_call.1} parent=0
    _
  %s18 = ssub.s32 1, %s16
  %s19 = scalar_select 0, %s18, %s16
  %20 = sst [smem:[#allocation5]] %s12
  $region1: #{tpu_custom_call.1} parent=0
    #allocation6 [shape = 'u8[8192]{0}', space=vmem, size = 0x2000, scoped, tag = 'input window, operand 0']
    #allocation7 [shape = 's32[2]{0}', space=sflag, size = 0x8, scoped, tag = 'scoped memory for tpu_custom_call.1']
    #allocation8 [shape = 's32[2]{0}', space=sflag, size = 0x8, scoped, tag = 'scoped memory for tpu_custom_call.1']
    #allocation9 [shape = 'u8[8192]{0}', space=vmem, size = 0x2000, scoped, tag = 'input window, operand 1, single buffered']
    #allocation10 [shape = 's32[1]{0}', space=sflag, size = 0x4, scoped, tag = 'scoped memory for tpu_custom_call.1']
    #allocation11 [shape = 'u8[8192]{0}', space=vmem, size = 0x2000, scoped, tag = 'input window, operand 2, single buffered']
    #allocation12 [shape = 'u8[16384]{0}', space=vmem, size = 0x4000, scoped, tag = 'input window, operand 3, single buffered']
    #allocation13 [shape = 's32[1]{0}', space=sflag, size = 0x4, scoped, tag = 'scoped memory for tpu_custom_call.1']
    #allocation14 [shape = 'u8[8192]{0}', space=vmem, size = 0x2000, scoped, tag = 'input window, operand 5, single buffered']
    #allocation15 [shape = 'u8[32768]{0}', space=vmem, size = 0x8000, scoped, tag = 'input window, operand 7, single buffered']
    #allocation16 [shape = 's32[1]{0}', space=sflag, size = 0x4, scoped, tag = 'scoped memory for tpu_custom_call.1']
    #allocation17 [shape = 'u8[32768]{0}', space=vmem, size = 0x8000, scoped, tag = 'input window, operand 9, single buffered']
    #allocation18 [shape = 'u8[8192]{0}', space=vmem, size = 0x2000, scoped, tag = 'output window, operand 0']
    %21 = vsyncpa [#allocation7], 0
    %s22 = scalar_lea.sflag [#allocation7], 1
    %23 = vsyncpa %s22, 0
    %24 = vsyncpa [#allocation10], 0
    %25 = vsyncpa [#allocation13], 0
    %26 = vsyncpa [#allocation16], 0
    %27 = vsyncpa [#allocation8], 0
    %s28 = scalar_lea.sflag [#allocation8], 1
    %29 = vsyncpa %s28, 0
    loop: start=0, step=1, limit=4
    $region2: #{tpu_custom_call.1} parent=1 // loop_pre_header
      _
    $region3: #{tpu_custom_call.1} parent=1 // loop_header
      %s31 = sphi 0, %s35
      %p32 = scmp.ge.s32.totalorder %s31, 4
      %s41 = sphi 0, %s43
      %s44 = sphi 0, %s41
      %s45 = sphi 0, %s44
      %s61 = sphi 0, %s45
      %s65 = sphi 0, %s65
      %s67 = sphi 0, %s65
      %s68 = sphi 0, %s67
      %s82 = sphi 0, %s68
      %s86 = sphi 0, %s86
      %s88 = sphi 0, %s86
      %s89 = sphi 0, %s88
      %s103 = sphi 0, %s89
      %s107 = sphi 0, %s107
      %s109 = sphi 0, %s107
      %s110 = sphi 0, %s109
      %s124 = sphi 0, %s110
      %s128 = sphi 0, %s128
      %s130 = sphi 0, %s128
      %s131 = sphi 0, %s130
      %s145 = sphi 0, %s131
      %s149 = sphi 0, %s149
      %s151 = sphi 0, %s149
      %s152 = sphi 0, %s151
      %s166 = sphi 0, %s152
      %s170 = sphi 0, %s170
      %s172 = sphi 0, %s170
      %s173 = sphi 0, %s172
      %s187 = sphi 0, %s173
      %s191 = sphi 0, %s191
      %s193 = sphi 0, %s191
      %s194 = sphi 0, %s193
      %s208 = sphi 0, %s194
      %s212 = sphi 0, %s212
      %s214 = sphi 0, %s212
      %s215 = sphi 0, %s214
      %s229 = sphi 0, %s215
      %s233 = sphi 0, %s233
      %s235 = sphi 0, %s233
      %s236 = sphi 0, %s235
      %s250 = sphi 0, %s236
      %s254 = sphi 0, %s254
      %s256 = sphi 0, %s254
      %s257 = sphi 0, %s256
      %s271 = sphi 0, %s257
      %s275 = sphi 0, %s275
      %s277 = sphi 0, %s275
      %s278 = sphi 0, %s277
      %s292 = sphi 0, %s278
      %s296 = sphi 0, %s296
      %s298 = sphi 0, %s296
      %s299 = sphi 0, %s298
      %s313 = sphi 0, %s299
      %s317 = sphi 0, %s317
      %s319 = sphi 0, %s317
      %s320 = sphi 0, %s319
      %s334 = sphi 0, %s320
      %s338 = sphi 0, %s338
      %s340 = sphi 0, %s338
      %s341 = sphi 0, %s340
      %s355 = sphi 0, %s341
      %s361 = sphi 0, %s363
      %s364 = sphi 0, %s361
      %s365 = sphi 0, %s364
      %s381 = sphi 0, %s365
    $region4: #{tpu_custom_call.1} parent=1 // loop_header_branch
      %34 = sbr.rel (%p32) target = $region8
    $region5: #{tpu_custom_call.1} parent=1 // loop_body
      %s36 = ssub.s32 %s31, 1
      %s37 = ssub.s32 %s31, 2
      %s38 = sadd.s32 %s31, 1
      %s39 = ssub.s32 %s31, %s38
      %p40 = scmp.eq.s32.totalorder %s39, 0
      %s42 = sadd.s32 %s41, 1
      %s43 = scalar_select %p40, %s41, %s42
      %p46 = pneg %p40
      %p47 = scmp.eq.s32.totalorder %s31, 1
      %p48 = por %p46, %p47
      %p49 = scmp.ne.s32.totalorder %s41, %s44
      %p50 = scmp.eq.s32.totalorder %s31, 0
      %p51 = por %p49, %p50
      %p52 = scmp.ne.s32.totalorder %s41, %s44
      %p53 = scmp.eq.s32.totalorder %s36, 1
      %p54 = por %p52, %p53
      %p55 = scmp.ne.s32.totalorder %s44, %s45
      %p56 = scmp.eq.s32.totalorder %s36, 0
      %p57 = por %p55, %p56
      %p58 = scmp.ne.s32.totalorder %s44, %s45
      %p59 = scmp.eq.s32.totalorder %s37, 1
      %p60 = por %p58, %p59
      %p62 = scmp.ne.s32.totalorder %s45, %s61
      %p63 = scmp.eq.s32.totalorder %s37, 0
      %p64 = por %p62, %p63
      %s66 = sadd.s32 %s65, 1
      %p69 = scmp.eq.s32.totalorder %s31, 1
      %p70 = scmp.ne.s32.totalorder %s65, %s67
      %p71 = scmp.eq.s32.totalorder %s31, 0
      %p72 = por %p70, %p71
      %p73 = scmp.ne.s32.totalorder %s65, %s67
      %p74 = scmp.eq.s32.totalorder %s36, 1
      %p75 = por %p73, %p74
      %p76 = scmp.ne.s32.totalorder %s67, %s68
      %p77 = scmp.eq.s32.totalorder %s36, 0
      %p78 = por %p76, %p77
      %p79 = scmp.ne.s32.totalorder %s67, %s68
      %p80 = scmp.eq.s32.totalorder %s37, 1
      %p81 = por %p79, %p80
      %p83 = scmp.ne.s32.totalorder %s68, %s82
      %p84 = scmp.eq.s32.totalorder %s37, 0
      %p85 = por %p83, %p84
      %s87 = sadd.s32 %s86, 1
      %p90 = scmp.eq.s32.totalorder %s31, 1
      %p91 = scmp.ne.s32.totalorder %s86, %s88
      %p92 = scmp.eq.s32.totalorder %s31, 0
      %p93 = por %p91, %p92
      %p94 = scmp.ne.s32.totalorder %s86, %s88
      %p95 = scmp.eq.s32.totalorder %s36, 1
      %p96 = por %p94, %p95
      %p97 = scmp.ne.s32.totalorder %s88, %s89
      %p98 = scmp.eq.s32.totalorder %s36, 0
      %p99 = por %p97, %p98
      %p100 = scmp.ne.s32.totalorder %s88, %s89
      %p101 = scmp.eq.s32.totalorder %s37, 1
      %p102 = por %p100, %p101
      %p104 = scmp.ne.s32.totalorder %s89, %s103
      %p105 = scmp.eq.s32.totalorder %s37, 0
      %p106 = por %p104, %p105
      %s108 = sadd.s32 %s107, 1
      %p111 = scmp.eq.s32.totalorder %s31, 1
      %p112 = scmp.ne.s32.totalorder %s107, %s109
      %p113 = scmp.eq.s32.totalorder %s31, 0
      %p114 = por %p112, %p113
      %p115 = scmp.ne.s32.totalorder %s107, %s109
      %p116 = scmp.eq.s32.totalorder %s36, 1
      %p117 = por %p115, %p116
      %p118 = scmp.ne.s32.totalorder %s109, %s110
      %p119 = scmp.eq.s32.totalorder %s36, 0
      %p120 = por %p118, %p119
      %p121 = scmp.ne.s32.totalorder %s109, %s110
      %p122 = scmp.eq.s32.totalorder %s37, 1
      %p123 = por %p121, %p122
      %p125 = scmp.ne.s32.totalorder %s110, %s124
      %p126 = scmp.eq.s32.totalorder %s37, 0
      %p127 = por %p125, %p126
      %s129 = sadd.s32 %s128, 1
      %p132 = scmp.eq.s32.totalorder %s31, 1
      %p133 = scmp.ne.s32.totalorder %s128, %s130
      %p134 = scmp.eq.s32.totalorder %s31, 0
      %p135 = por %p133, %p134
      %p136 = scmp.ne.s32.totalorder %s128, %s130
      %p137 = scmp.eq.s32.totalorder %s36, 1
      %p138 = por %p136, %p137
      %p139 = scmp.ne.s32.totalorder %s130, %s131
      %p140 = scmp.eq.s32.totalorder %s36, 0
      %p141 = por %p139, %p140
      %p142 = scmp.ne.s32.totalorder %s130, %s131
      %p143 = scmp.eq.s32.totalorder %s37, 1
      %p144 = por %p142, %p143
      %p146 = scmp.ne.s32.totalorder %s131, %s145
      %p147 = scmp.eq.s32.totalorder %s37, 0
      %p148 = por %p146, %p147
      %s150 = sadd.s32 %s149, 1
      %p153 = scmp.eq.s32.totalorder %s31, 1
      %p154 = scmp.ne.s32.totalorder %s149, %s151
      %p155 = scmp.eq.s32.totalorder %s31, 0
      %p156 = por %p154, %p155
      %p157 = scmp.ne.s32.totalorder %s149, %s151
      %p158 = scmp.eq.s32.totalorder %s36, 1
      %p159 = por %p157, %p158
      %p160 = scmp.ne.s32.totalorder %s151, %s152
      %p161 = scmp.eq.s32.totalorder %s36, 0
      %p162 = por %p160, %p161
      %p163 = scmp.ne.s32.totalorder %s151, %s152
      %p164 = scmp.eq.s32.totalorder %s37, 1
      %p165 = por %p163, %p164
      %p167 = scmp.ne.s32.totalorder %s152, %s166
      %p168 = scmp.eq.s32.totalorder %s37, 0
      %p169 = por %p167, %p168
      %s171 = sadd.s32 %s170, 1
      %p174 = scmp.eq.s32.totalorder %s31, 1
      %p175 = scmp.ne.s32.totalorder %s170, %s172
      %p176 = scmp.eq.s32.totalorder %s31, 0
      %p177 = por %p175, %p176
      %p178 = scmp.ne.s32.totalorder %s170, %s172
      %p179 = scmp.eq.s32.totalorder %s36, 1
      %p180 = por %p178, %p179
      %p181 = scmp.ne.s32.totalorder %s172, %s173
      %p182 = scmp.eq.s32.totalorder %s36, 0
      %p183 = por %p181, %p182
      %p184 = scmp.ne.s32.totalorder %s172, %s173
      %p185 = scmp.eq.s32.totalorder %s37, 1
      %p186 = por %p184, %p185
      %p188 = scmp.ne.s32.totalorder %s173, %s187
      %p189 = scmp.eq.s32.totalorder %s37, 0
      %p190 = por %p188, %p189
      %s192 = sadd.s32 %s191, 1
      %p195 = scmp.eq.s32.totalorder %s31, 1
      %p196 = scmp.ne.s32.totalorder %s191, %s193
      %p197 = scmp.eq.s32.totalorder %s31, 0
      %p198 = por %p196, %p197
      %p199 = scmp.ne.s32.totalorder %s191, %s193
      %p200 = scmp.eq.s32.totalorder %s36, 1
      %p201 = por %p199, %p200
      %p202 = scmp.ne.s32.totalorder %s193, %s194
      %p203 = scmp.eq.s32.totalorder %s36, 0
      %p204 = por %p202, %p203
      %p205 = scmp.ne.s32.totalorder %s193, %s194
      %p206 = scmp.eq.s32.totalorder %s37, 1
      %p207 = por %p205, %p206
      %p209 = scmp.ne.s32.totalorder %s194, %s208
      %p210 = scmp.eq.s32.totalorder %s37, 0
      %p211 = por %p209, %p210
      %s213 = sadd.s32 %s212, 1
      %p216 = scmp.eq.s32.totalorder %s31, 1
      %p217 = scmp.ne.s32.totalorder %s212, %s214
      %p218 = scmp.eq.s32.totalorder %s31, 0
      %p219 = por %p217, %p218
      %p220 = scmp.ne.s32.totalorder %s212, %s214
      %p221 = scmp.eq.s32.totalorder %s36, 1
      %p222 = por %p220, %p221
      %p223 = scmp.ne.s32.totalorder %s214, %s215
      %p224 = scmp.eq.s32.totalorder %s36, 0
      %p225 = por %p223, %p224
      %p226 = scmp.ne.s32.totalorder %s214, %s215
      %p227 = scmp.eq.s32.totalorder %s37, 1
      %p228 = por %p226, %p227
      %p230 = scmp.ne.s32.totalorder %s215, %s229
      %p231 = scmp.eq.s32.totalorder %s37, 0
      %p232 = por %p230, %p231
      %s234 = sadd.s32 %s233, 1
      %p237 = scmp.eq.s32.totalorder %s31, 1
      %p238 = scmp.ne.s32.totalorder %s233, %s235
      %p239 = scmp.eq.s32.totalorder %s31, 0
      %p240 = por %p238, %p239
      %p241 = scmp.ne.s32.totalorder %s233, %s235
      %p242 = scmp.eq.s32.totalorder %s36, 1
      %p243 = por %p241, %p242
      %p244 = scmp.ne.s32.totalorder %s235, %s236
      %p245 = scmp.eq.s32.totalorder %s36, 0
      %p246 = por %p244, %p245
      %p247 = scmp.ne.s32.totalorder %s235, %s236
      %p248 = scmp.eq.s32.totalorder %s37, 1
      %p249 = por %p247, %p248
      %p251 = scmp.ne.s32.totalorder %s236, %s250
      %p252 = scmp.eq.s32.totalorder %s37, 0
      %p253 = por %p251, %p252
      %s255 = sadd.s32 %s254, 1
      %p258 = scmp.eq.s32.totalorder %s31, 1
      %p259 = scmp.ne.s32.totalorder %s254, %s256
      %p260 = scmp.eq.s32.totalorder %s31, 0
      %p261 = por %p259, %p260
      %p262 = scmp.ne.s32.totalorder %s254, %s256
      %p263 = scmp.eq.s32.totalorder %s36, 1
      %p264 = por %p262, %p263
      %p265 = scmp.ne.s32.totalorder %s256, %s257
      %p266 = scmp.eq.s32.totalorder %s36, 0
      %p267 = por %p265, %p266
      %p268 = scmp.ne.s32.totalorder %s256, %s257
      %p269 = scmp.eq.s32.totalorder %s37, 1
      %p270 = por %p268, %p269
      %p272 = scmp.ne.s32.totalorder %s257, %s271
      %p273 = scmp.eq.s32.totalorder %s37, 0
      %p274 = por %p272, %p273
      %s276 = sadd.s32 %s275, 1
      %p279 = scmp.eq.s32.totalorder %s31, 1
      %p280 = scmp.ne.s32.totalorder %s275, %s277
      %p281 = scmp.eq.s32.totalorder %s31, 0
      %p282 = por %p280, %p281
      %p283 = scmp.ne.s32.totalorder %s275, %s277
      %p284 = scmp.eq.s32.totalorder %s36, 1
      %p285 = por %p283, %p284
      %p286 = scmp.ne.s32.totalorder %s277, %s278
      %p287 = scmp.eq.s32.totalorder %s36, 0
      %p288 = por %p286, %p287
      %p289 = scmp.ne.s32.totalorder %s277, %s278
      %p290 = scmp.eq.s32.totalorder %s37, 1
      %p291 = por %p289, %p290
      %p293 = scmp.ne.s32.totalorder %s278, %s292
      %p294 = scmp.eq.s32.totalorder %s37, 0
      %p295 = por %p293, %p294
      %s297 = sadd.s32 %s296, 1
      %p300 = scmp.eq.s32.totalorder %s31, 1
      %p301 = scmp.ne.s32.totalorder %s296, %s298
      %p302 = scmp.eq.s32.totalorder %s31, 0
      %p303 = por %p301, %p302
      %p304 = scmp.ne.s32.totalorder %s296, %s298
      %p305 = scmp.eq.s32.totalorder %s36, 1
      %p306 = por %p304, %p305
      %p307 = scmp.ne.s32.totalorder %s298, %s299
      %p308 = scmp.eq.s32.totalorder %s36, 0
      %p309 = por %p307, %p308
      %p310 = scmp.ne.s32.totalorder %s298, %s299
      %p311 = scmp.eq.s32.totalorder %s37, 1
      %p312 = por %p310, %p311
      %p314 = scmp.ne.s32.totalorder %s299, %s313
      %p315 = scmp.eq.s32.totalorder %s37, 0
      %p316 = por %p314, %p315
      %s318 = sadd.s32 %s317, 1
      %p321 = scmp.eq.s32.totalorder %s31, 1
      %p322 = scmp.ne.s32.totalorder %s317, %s319
      %p323 = scmp.eq.s32.totalorder %s31, 0
      %p324 = por %p322, %p323
      %p325 = scmp.ne.s32.totalorder %s317, %s319
      %p326 = scmp.eq.s32.totalorder %s36, 1
      %p327 = por %p325, %p326
      %p328 = scmp.ne.s32.totalorder %s319, %s320
      %p329 = scmp.eq.s32.totalorder %s36, 0
      %p330 = por %p328, %p329
      %p331 = scmp.ne.s32.totalorder %s319, %s320
      %p332 = scmp.eq.s32.totalorder %s37, 1
      %p333 = por %p331, %p332
      %p335 = scmp.ne.s32.totalorder %s320, %s334
      %p336 = scmp.eq.s32.totalorder %s37, 0
      %p337 = por %p335, %p336
      %s339 = sadd.s32 %s338, 1
      %p342 = scmp.eq.s32.totalorder %s31, 1
      %p343 = scmp.ne.s32.totalorder %s338, %s340
      %p344 = scmp.eq.s32.totalorder %s31, 0
      %p345 = por %p343, %p344
      %p346 = scmp.ne.s32.totalorder %s338, %s340
      %p347 = scmp.eq.s32.totalorder %s36, 1
      %p348 = por %p346, %p347
      %p349 = scmp.ne.s32.totalorder %s340, %s341
      %p350 = scmp.eq.s32.totalorder %s36, 0
      %p351 = por %p349, %p350
      %p352 = scmp.ne.s32.totalorder %s340, %s341
      %p353 = scmp.eq.s32.totalorder %s37, 1
      %p354 = por %p352, %p353
      %p356 = scmp.ne.s32.totalorder %s341, %s355
      %p357 = scmp.eq.s32.totalorder %s37, 0
      %p358 = por %p356, %p357
      %s359 = ssub.s32 %s31, %s38
      %p360 = scmp.eq.s32.totalorder %s359, 0
      %s362 = sadd.s32 %s361, 1
      %s363 = scalar_select %p360, %s361, %s362
      %p366 = pneg %p360
      %p367 = scmp.eq.s32.totalorder %s31, 1
      %p368 = por %p366, %p367
      %p369 = scmp.ne.s32.totalorder %s361, %s364
      %p370 = scmp.eq.s32.totalorder %s31, 0
      %p371 = por %p369, %p370
      %p372 = scmp.ne.s32.totalorder %s361, %s364
      %p373 = scmp.eq.s32.totalorder %s36, 1
      %p374 = por %p372, %p373
      %p375 = scmp.ne.s32.totalorder %s364, %s365
      %p376 = scmp.eq.s32.totalorder %s36, 0
      %p377 = por %p375, %p376
      %p378 = scmp.ne.s32.totalorder %s364, %s365
      %p379 = scmp.eq.s32.totalorder %s37, 1
      %p380 = por %p378, %p379
      %p382 = scmp.ne.s32.totalorder %s365, %s381
      %p383 = scmp.eq.s32.totalorder %s37, 0
      %p384 = por %p382, %p383
      %p385 = scmp.le.s32.totalorder 1, %s31
      %p386 = scmp.lt.s32.totalorder %s31, 3
      %p387 = pnand %p385, %p386
      %p388 = pneg %p387
      // Predicated region
      $region9: #{tpu_custom_call.1} parent=5 // pred_check
        _
      $region10: #{tpu_custom_call.1} parent=5 // pred_check_branch
        %390 = sbr.rel (%p387) target = $region12
      $region11: #{tpu_custom_call.1} parent=5 // pred_region
        %s391 = ssub.s32 %s31, 1
        // Predicated region
        $region13: #{tpu_custom_call.1} parent=11 // pred_check
          %p392 = pneg %p78
        $region14: #{tpu_custom_call.1} parent=11 // pred_check_branch
          %394 = sbr.rel (%p392) target = $region16
        $region15: #{tpu_custom_call.1} parent=11 // pred_region
          %396 = vsyncadd [#allocation10], 0
          %s397 = sshll.u32 %s1, 4
          %s398 = int_to_ptr.hbm [resolvable:$true] %s397
          %s399 = sshll.u32 [#allocation9], 4
          %s400 = int_to_ptr.vmem [resolvable:$true] %s399
          %405 = dma.hbm_to_vmem [thread:$0]  %s398, 256, %s400, [#allocation10], 128, 128, 8
        $region16: #{tpu_custom_call.1} parent=11 // pred_fallthru
          _
        // Predicated region
        $region17: #{tpu_custom_call.1} parent=11 // pred_check
          %p406 = pneg %p99
        $region18: #{tpu_custom_call.1} parent=11 // pred_check_branch
          %408 = sbr.rel (%p406) target = $region20
        $region19: #{tpu_custom_call.1} parent=11 // pred_region
          %410 = vsyncadd [#allocation10], 0
          %s411 = sshll.u32 %s2, 4
          %s412 = int_to_ptr.hbm [resolvable:$true] %s411
          %s413 = sshll.u32 [#allocation11], 4
          %s414 = int_to_ptr.vmem [resolvable:$true] %s413
          %419 = dma.hbm_to_vmem [thread:$0]  %s412, 256, %s414, [#allocation10], 128, 128, 8
        $region20: #{tpu_custom_call.1} parent=11 // pred_fallthru
          _
        // Predicated region
        $region21: #{tpu_custom_call.1} parent=11 // pred_check
          %p420 = pneg %p120
        $region22: #{tpu_custom_call.1} parent=11 // pred_check_branch
          %422 = sbr.rel (%p420) target = $region24
        $region23: #{tpu_custom_call.1} parent=11 // pred_region
          %424 = vsyncadd [#allocation13], 0
          %s425 = sshll.u32 %s3, 4
          %s426 = int_to_ptr.hbm [resolvable:$true] %s425
          %s427 = sshll.u32 [#allocation12], 4
          %s428 = int_to_ptr.vmem [resolvable:$true] %s427
          %433 = dma.hbm_to_vmem [thread:$0]  %s426, 512, %s428, [#allocation13], 64, 64, 4
        $region24: #{tpu_custom_call.1} parent=11 // pred_fallthru
          _
        // Predicated region
        $region25: #{tpu_custom_call.1} parent=11 // pred_check
          %p434 = pneg %p141
        $region26: #{tpu_custom_call.1} parent=11 // pred_check_branch
          %436 = sbr.rel (%p434) target = $region28
        $region27: #{tpu_custom_call.1} parent=11 // pred_region
          _
        $region28: #{tpu_custom_call.1} parent=11 // pred_fallthru
          _
        // Predicated region
        $region29: #{tpu_custom_call.1} parent=11 // pred_check
          %p437 = pneg %p162
        $region30: #{tpu_custom_call.1} parent=11 // pred_check_branch
          %439 = sbr.rel (%p437) target = $region32
        $region31: #{tpu_custom_call.1} parent=11 // pred_region
          %441 = vsyncadd [#allocation13], 0
          %s442 = sshll.u32 %s5, 4
          %s443 = int_to_ptr.hbm [resolvable:$true] %s442
          %s444 = sshll.u32 [#allocation14], 4
          %s445 = int_to_ptr.vmem [resolvable:$true] %s444
          %450 = dma.hbm_to_vmem [thread:$0]  %s443, 256, %s445, [#allocation13], 64, 64, 4
        $region32: #{tpu_custom_call.1} parent=11 // pred_fallthru
          _
        // Predicated region
        $region33: #{tpu_custom_call.1} parent=11 // pred_check
          %p451 = pneg %p183
        $region34: #{tpu_custom_call.1} parent=11 // pred_check_branch
          %453 = sbr.rel (%p451) target = $region36
        $region35: #{tpu_custom_call.1} parent=11 // pred_region
          _
        $region36: #{tpu_custom_call.1} parent=11 // pred_fallthru
          _
        // Predicated region
        $region37: #{tpu_custom_call.1} parent=11 // pred_check
          %p454 = pneg %p204
        $region38: #{tpu_custom_call.1} parent=11 // pred_check_branch
          %456 = sbr.rel (%p454) target = $region40
        $region39: #{tpu_custom_call.1} parent=11 // pred_region
          %458 = vsyncadd [#allocation16], 0
          %s459 = sshll.u32 %s7, 4
          %s460 = int_to_ptr.hbm [resolvable:$true] %s459
          %s461 = sshll.u32 [#allocation15], 4
          %s462 = int_to_ptr.vmem [resolvable:$true] %s461
          %467 = dma.hbm_to_vmem [thread:$0]  %s460, 1024, %s462, [#allocation16], 64, 64, 4
        $region40: #{tpu_custom_call.1} parent=11 // pred_fallthru
          _
        // Predicated region
        $region41: #{tpu_custom_call.1} parent=11 // pred_check
          %p468 = pneg %p225
        $region42: #{tpu_custom_call.1} parent=11 // pred_check_branch
          %470 = sbr.rel (%p468) target = $region44
        $region43: #{tpu_custom_call.1} parent=11 // pred_region
          _
        $region44: #{tpu_custom_call.1} parent=11 // pred_fallthru
          _
        // Predicated region
        $region45: #{tpu_custom_call.1} parent=11 // pred_check
          %p471 = pneg %p246
        $region46: #{tpu_custom_call.1} parent=11 // pred_check_branch
          %473 = sbr.rel (%p471) target = $region48
        $region47: #{tpu_custom_call.1} parent=11 // pred_region
          %475 = vsyncadd [#allocation16], 0
          %s476 = sshll.u32 %s9, 4
          %s477 = int_to_ptr.hbm [resolvable:$true] %s476
          %s478 = sshll.u32 [#allocation17], 4
          %s479 = int_to_ptr.vmem [resolvable:$true] %s478
          %484 = dma.hbm_to_vmem [thread:$0]  %s477, 1024, %s479, [#allocation16], 64, 64, 4
        $region48: #{tpu_custom_call.1} parent=11 // pred_fallthru
          _
        // Predicated region
        $region49: #{tpu_custom_call.1} parent=11 // pred_check
          %p485 = pneg %p267
        $region50: #{tpu_custom_call.1} parent=11 // pred_check_branch
          %487 = sbr.rel (%p485) target = $region52
        $region51: #{tpu_custom_call.1} parent=11 // pred_region
          _
        $region52: #{tpu_custom_call.1} parent=11 // pred_fallthru
          _
        // Predicated region
        $region53: #{tpu_custom_call.1} parent=11 // pred_check
          %p488 = pneg %p288
        $region54: #{tpu_custom_call.1} parent=11 // pred_check_branch
          %490 = sbr.rel (%p488) target = $region56
        $region55: #{tpu_custom_call.1} parent=11 // pred_region
          _
        $region56: #{tpu_custom_call.1} parent=11 // pred_fallthru
          _
        // Predicated region
        $region57: #{tpu_custom_call.1} parent=11 // pred_check
          %p491 = pneg %p309
        $region58: #{tpu_custom_call.1} parent=11 // pred_check_branch
          %493 = sbr.rel (%p491) target = $region60
        $region59: #{tpu_custom_call.1} parent=11 // pred_region
          _
        $region60: #{tpu_custom_call.1} parent=11 // pred_fallthru
          _
        // Predicated region
        $region61: #{tpu_custom_call.1} parent=11 // pred_check
          %p494 = pneg %p330
        $region62: #{tpu_custom_call.1} parent=11 // pred_check_branch
          %496 = sbr.rel (%p494) target = $region64
        $region63: #{tpu_custom_call.1} parent=11 // pred_region
          _
        $region64: #{tpu_custom_call.1} parent=11 // pred_fallthru
          _
        // Predicated region
        $region65: #{tpu_custom_call.1} parent=11 // pred_check
          %p497 = pneg %p351
        $region66: #{tpu_custom_call.1} parent=11 // pred_check_branch
          %499 = sbr.rel (%p497) target = $region68
        $region67: #{tpu_custom_call.1} parent=11 // pred_region
          _
        $region68: #{tpu_custom_call.1} parent=11 // pred_fallthru
          _
      $region12: #{tpu_custom_call.1} parent=5 // pred_fallthru
        _
      %p500 = scmp.lt.s32.totalorder %s31, 2
      // Predicated region
      $region69: #{tpu_custom_call.1} parent=5 // pred_check
        %p501 = pneg %p500
      $region70: #{tpu_custom_call.1} parent=5 // pred_check_branch
        %503 = sbr.rel (%p501) target = $region72
      $region71: #{tpu_custom_call.1} parent=5 // pred_region
        // Predicated region
        $region73: #{tpu_custom_call.1} parent=71 // pred_check
          %p504 = pneg %p51
        $region74: #{tpu_custom_call.1} parent=71 // pred_check_branch
          %506 = sbr.rel (%p504) target = $region76
        $region75: #{tpu_custom_call.1} parent=71 // pred_region
          %s507 = sand.u32 %s41, 1
          %s508 = scalar_lea.sflag [#allocation7], %s507
          %s509 = sand.u32 %s41, 1
          %s510 = smul.addr %s509, 8
          %s511 = scalar_lea.vmem [#allocation6], %s510
          %513 = vsyncadd %s508, 0
          %s514 = smul.addr %s31, 8
          %s515 = scalar_lea.hbm %s0, %s514
          %s517 = sshll.u32 %s515, 4
          %s518 = int_to_ptr.hbm [resolvable:$true] %s517
          %s519 = sshll.u32 %s511, 4
          %s520 = int_to_ptr.vmem [resolvable:$true] %s519
          %522 = dma.hbm_to_vmem [thread:$0]  %s518, 128, %s520, %s508
        $region76: #{tpu_custom_call.1} parent=71 // pred_fallthru
          _
      $region72: #{tpu_custom_call.1} parent=5 // pred_fallthru
        _
      %p523 = scmp.le.s32.totalorder 1, %s31
      %p524 = scmp.lt.s32.totalorder %s31, 3
      %p525 = pnand %p523, %p524
      %p526 = pneg %p525
      // Predicated region
      $region77: #{tpu_custom_call.1} parent=5 // pred_check
        _
      $region78: #{tpu_custom_call.1} parent=5 // pred_check_branch
        %528 = sbr.rel (%p525) target = $region80
      $region79: #{tpu_custom_call.1} parent=5 // pred_region
        %s529 = ssub.s32 %s31, 1
        %s530 = sand.u32 %s44, 1
        %s531 = scalar_lea.sflag [#allocation7], %s530
        %s532 = sand.u32 %s44, 1
        %s533 = smul.addr %s532, 8
        %s534 = scalar_lea.vmem [#allocation6], %s533
        // Predicated region
        $region81: #{tpu_custom_call.1} parent=79 // pred_check
          %p535 = pneg %p57
        $region82: #{tpu_custom_call.1} parent=79 // pred_check_branch
          %537 = sbr.rel (%p535) target = $region84
        $region83: #{tpu_custom_call.1} parent=79 // pred_region
          %539 = dma.done %s531, 128
        $region84: #{tpu_custom_call.1} parent=79 // pred_fallthru
          _
        // Predicated region
        $region85: #{tpu_custom_call.1} parent=79 // pred_check
          %p540 = pneg %p78
        $region86: #{tpu_custom_call.1} parent=79 // pred_check_branch
          %542 = sbr.rel (%p540) target = $region88
        $region87: #{tpu_custom_call.1} parent=79 // pred_region
          %544 = dma.done [#allocation10], 256
        $region88: #{tpu_custom_call.1} parent=79 // pred_fallthru
          _
        // Predicated region
        $region89: #{tpu_custom_call.1} parent=79 // pred_check
          %p545 = pneg %p99
        $region90: #{tpu_custom_call.1} parent=79 // pred_check_branch
          %547 = sbr.rel (%p545) target = $region92
        $region91: #{tpu_custom_call.1} parent=79 // pred_region
          %549 = dma.done [#allocation10], 256
        $region92: #{tpu_custom_call.1} parent=79 // pred_fallthru
          _
        // Predicated region
        $region93: #{tpu_custom_call.1} parent=79 // pred_check
          %p550 = pneg %p120
        $region94: #{tpu_custom_call.1} parent=79 // pred_check_branch
          %552 = sbr.rel (%p550) target = $region96
        $region95: #{tpu_custom_call.1} parent=79 // pred_region
          %554 = dma.done [#allocation13], 512
        $region96: #{tpu_custom_call.1} parent=79 // pred_fallthru
          _
        // Predicated region
        $region97: #{tpu_custom_call.1} parent=79 // pred_check
          %p555 = pneg %p162
        $region98: #{tpu_custom_call.1} parent=79 // pred_check_branch
          %557 = sbr.rel (%p555) target = $region100
        $region99: #{tpu_custom_call.1} parent=79 // pred_region
          %559 = dma.done [#allocation13], 256
        $region100: #{tpu_custom_call.1} parent=79 // pred_fallthru
          _
        // Predicated region
        $region101: #{tpu_custom_call.1} parent=79 // pred_check
          %p560 = pneg %p204
        $region102: #{tpu_custom_call.1} parent=79 // pred_check_branch
          %562 = sbr.rel (%p560) target = $region104
        $region103: #{tpu_custom_call.1} parent=79 // pred_region
          %564 = dma.done [#allocation16], 1024
        $region104: #{tpu_custom_call.1} parent=79 // pred_fallthru
          _
        // Predicated region
        $region105: #{tpu_custom_call.1} parent=79 // pred_check
          %p565 = pneg %p246
        $region106: #{tpu_custom_call.1} parent=79 // pred_check_branch
          %567 = sbr.rel (%p565) target = $region108
        $region107: #{tpu_custom_call.1} parent=79 // pred_region
          %569 = dma.done [#allocation16], 1024
        $region108: #{tpu_custom_call.1} parent=79 // pred_fallthru
          _
        %s570 = sand.u32 %s44, 1
        %s571 = scalar_lea.sflag [#allocation7], %s570
        %s572 = sand.u32 %s44, 1
        %s573 = smul.addr %s572, 8
        %s574 = scalar_lea.vmem [#allocation6], %s573
        %p575 = pneg %p57
        %p576 = pneg %p54
        %p577 = pneg %p78
        %p578 = pneg %p75
        %p579 = pneg %p99
        %p580 = pneg %p96
        %p581 = pneg %p120
        %p582 = pneg %p117
        %p583 = pneg %p141
        %p584 = pneg %p138
        %p585 = pneg %p162
        %p586 = pneg %p159
        %p587 = pneg %p183
        %p588 = pneg %p180
        %p589 = pneg %p204
        %p590 = pneg %p201
        %p591 = pneg %p225
        %p592 = pneg %p222
        %p593 = pneg %p246
        %p594 = pneg %p243
        %p595 = pneg %p267
        %p596 = pneg %p264
        %p597 = pneg %p288
        %p598 = pneg %p285
        %p599 = pneg %p309
        %p600 = pneg %p306
        %p601 = pneg %p330
        %p602 = pneg %p327
        %p603 = pneg %p351
        %p604 = pneg %p348
        %p605 = pneg %p377
        %p606 = pneg %p374
        %s607 = sand.u32 %s364, 1
        %s608 = scalar_lea.sflag [#allocation8], %s607
        %s609 = sand.u32 %s364, 1
        %s610 = smul.addr %s609, 8
        %s611 = scalar_lea.vmem [#allocation18], %s610
        %v613 = vld [vmem:[#allocation11] sm:$0xff]
        %v614 = vld [vmem:[#allocation11 + $0x8] sm:$0xff]
        %v615 = vpack.c.bf16 %v614, %v613
        %p616 = scmp.eq.s32.totalorder %s36, 0
        // Predicated region
        $region109: #{tpu_custom_call.1} parent=79 // pred_check
          %p617 = pneg %p616
        $region110: #{tpu_custom_call.1} parent=79 // pred_check_branch
          %619 = sbr.rel (%p617) target = $region112
        $region111: #{tpu_custom_call.1} parent=79 // pred_region
          %v620 = vld [vmem:[#allocation9] sm:$0xff]
          %v621 = vld [vmem:[#allocation9 + $0x8] sm:$0xff]
          %v622 = vpack.c.bf16 %v621, %v620
          %v623 = vld [vmem:[#allocation14] sm:$0xf]
          %v624 = vld [vmem:[#allocation14 + $0x4] sm:$0xf]
          %v625 = vld [vmem:[#allocation14 + $0x8] sm:$0xf]
          %v626 = vld [vmem:[#allocation14 + $0xc] sm:$0xf]
          %v627 = vld [vmem:[%s6] sm:$0x1]
          %v629 = vperm.slane %v627, 0
          %v635 = vunpack.c.l.b16 %v623
          %v636 = vunpack.c.l.b16 %v624
          %v637 = vunpack.c.l.b16 %v625
          %v638 = vunpack.c.l.b16 %v626
          %v639 = vpack.c.b16 %v636, %v635
          %v640 = vpack.c.b16 %v638, %v637
          %vm643 = vcmask 261120
          %v645 = vsel %vm643, %v622, 0
          %647 = vmatpush.bf16.msra.mxu0 0
          %648 = vmatpush.bf16.msra.mxu0 0
          %649 = vmatpush.bf16.msra.mxu0 0
          %650 = vmatpush.bf16.msra.mxu0 0
          %651 = vmatpush.bf16.msra.mxu0 0
          %652 = vmatpush.bf16.msra.mxu0 0
          %653 = vmatpush.bf16.msra.mxu0 %v640
          %654 = vmatpush.bf16.msra.mxu0 %v639
          %655 = vmatmul.bf16.gmra.mxu0 %v645
          %v656 = vpop.f32.mrf.mxu0
          %v657 = vadd.f32 %v629, %v656
          %v658 = vpop.f32.mrf.mxu0
          %v659 = vadd.f32 %v629, %v658
          %660 = vdwg.mxu0
          %v661 = vpack.c.bf16 %v659, %v657
          %v662 = vld [vmem:[#allocation15 + $0x20] sm:$0xf]
          %v663 = vld [vmem:[#allocation15 + $0x24] sm:$0xf]
          %v664 = vld [vmem:[#allocation15 + $0x28] sm:$0xf]
          %v665 = vld [vmem:[#allocation15 + $0x2c] sm:$0xf]
          %v666 = vld [vmem:[#allocation15 + $0x30] sm:$0xf]
          %v667 = vld [vmem:[#allocation15 + $0x34] sm:$0xf]
          %v668 = vld [vmem:[#allocation15 + $0x38] sm:$0xf]
          %v669 = vld [vmem:[#allocation15 + $0x3c] sm:$0xf]
          %v678 = vunpack.c.l.b16 %v662
          %v679 = vunpack.c.l.b16 %v663
          %v680 = vunpack.c.l.b16 %v664
          %v681 = vunpack.c.l.b16 %v665
          %v682 = vunpack.c.l.b16 %v666
          %v683 = vunpack.c.l.b16 %v667
          %v684 = vunpack.c.l.b16 %v668
          %v685 = vunpack.c.l.b16 %v669
          %v686 = vpack.c.b16 %v679, %v678
          %v687 = vpack.c.b16 %v681, %v680
          %v688 = vpack.c.b16 %v683, %v682
          %v689 = vpack.c.b16 %v685, %v684
          %vm694 = vcmask 523264
          %v696 = vsel %vm694, %v661, 0
          %698 = vmatpush.bf16.msra.mxu0 0
          %699 = vmatpush.bf16.msra.mxu0 0
          %700 = vmatpush.bf16.msra.mxu0 0
          %701 = vmatpush.bf16.msra.mxu0 0
          %702 = vmatpush.bf16.msra.mxu0 %v689
          %703 = vmatpush.bf16.msra.mxu0 %v688
          %704 = vmatpush.bf16.msra.mxu0 %v687
          %705 = vmatpush.bf16.msra.mxu0 %v686
          %706 = vmatmul.bf16.gmra.mxu0 %v696
          %v707 = vpop.f32.mrf.mxu0
          %v708 = vadd.f32 0.0, %v707
          %v709 = vpop.f32.mrf.mxu0
          %v710 = vadd.f32 0.0, %v709
          %711 = vdwg.mxu0
          %v712 = vpack.c.bf16 %v710, %v708
          %v713 = vld [vmem:[%s8] sm:$0x1]
          %v715 = vperm.slane %v713, 0
          %vm717 = vcmask 130048
          %v719 = vsel %vm717, %v615, 0
          %721 = vmatpush.bf16.msra.mxu0 0
          %722 = vmatpush.bf16.msra.mxu0 0
          %723 = vmatpush.bf16.msra.mxu0 0
          %724 = vmatpush.bf16.msra.mxu0 0
          %725 = vmatpush.bf16.msra.mxu0 0
          %726 = vmatpush.bf16.msra.mxu0 0
          %727 = vmatpush.bf16.msra.mxu0 0
          %728 = vmatpush.bf16.msra.mxu0 %v712
          %729 = vmatmul.bf16.gmra.mxu0 %v719
          %v730 = vpop.f32.mrf.mxu0
          %v731 = vadd.f32 %v715, %v730
          %v732 = vpop.f32.mrf.mxu0
          %v733 = vadd.f32 %v715, %v732
          %734 = vdwg.mxu0
          %735 = vst [vmem:[#allocation2] sm:$0xff] %v731
          %736 = vst [vmem:[#allocation2 + $0x8] sm:$0xff] %v733
          %737 = vst [vmem:[#allocation3] sm:$0xff] 0.0
          %738 = vst [vmem:[#allocation3 + $0x8] sm:$0xff] 0.0
          %739 = vst [vmem:[#allocation3 + $0x10] sm:$0xff] 0.0
          %740 = vst [vmem:[#allocation3 + $0x18] sm:$0xff] 0.0
          %741 = vst [vmem:[#allocation3 + $0x20] sm:$0xff] 0.0
          %742 = vst [vmem:[#allocation3 + $0x28] sm:$0xff] 0.0
          %743 = vst [vmem:[#allocation3 + $0x30] sm:$0xff] 0.0
          %744 = vst [vmem:[#allocation3 + $0x38] sm:$0xff] 0.0
          %745 = vst [vmem:[#allocation3 + $0x40] sm:$0xff] 0.0
          %746 = vst [vmem:[#allocation3 + $0x48] sm:$0xff] 0.0
          %747 = vst [vmem:[#allocation3 + $0x50] sm:$0xff] 0.0
          %748 = vst [vmem:[#allocation3 + $0x58] sm:$0xff] 0.0
          %749 = vst [vmem:[#allocation3 + $0x60] sm:$0xff] 0.0
          %750 = vst [vmem:[#allocation3 + $0x68] sm:$0xff] 0.0
          %751 = vst [vmem:[#allocation3 + $0x70] sm:$0xff] 0.0
          %752 = vst [vmem:[#allocation3 + $0x78] sm:$0xff] 0.0
          %753 = vst.msk [vmem:[#allocation3] sm:$0xff] %vm717, %v613
          %754 = vst.msk [vmem:[#allocation3 + $0x8] sm:$0xff] %vm717, %v614
          %757 = vrot.lane.b32.xlu0 %v613, 16
          %v758 = vpop.permute.xlu0 %757
          %759 = vrot.lane.b32.xlu0 %v614, 16
          %v760 = vpop.permute.xlu0 %759
          %vm763 = vcmask 261248
          %764 = vst.msk [vmem:[#allocation3 + $0x10] sm:$0xff] %vm763, %v758
          %765 = vst.msk [vmem:[#allocation3 + $0x18] sm:$0xff] %vm763, %v760
          %766 = vrot.lane.b32.xlu0 %v613, 32
          %v767 = vpop.permute.xlu0 %766
          %768 = vrot.lane.b32.xlu0 %v614, 32
          %v769 = vpop.permute.xlu0 %768
          %vm772 = vcmask 392448
          %773 = vst.msk [vmem:[#allocation3 + $0x20] sm:$0xff] %vm772, %v767
          %774 = vst.msk [vmem:[#allocation3 + $0x28] sm:$0xff] %vm772, %v769
          %775 = vrot.lane.b32.xlu0 %v613, 48
          %v776 = vpop.permute.xlu0 %775
          %777 = vrot.lane.b32.xlu0 %v614, 48
          %v778 = vpop.permute.xlu0 %777
          %vm781 = vcmask 523648
          %782 = vst.msk [vmem:[#allocation3 + $0x30] sm:$0xff] %vm781, %v776
          %783 = vst.msk [vmem:[#allocation3 + $0x38] sm:$0xff] %vm781, %v778
          %784 = vrot.lane.b32.xlu0 %v613, 64
          %v785 = vpop.permute.xlu0 %784
          %786 = vrot.lane.b32.xlu0 %v614, 64
          %v787 = vpop.permute.xlu0 %786
          %vm790 = vcmask 654848
          %791 = vst.msk [vmem:[#allocation3 + $0x40] sm:$0xff] %vm790, %v785
          %792 = vst.msk [vmem:[#allocation3 + $0x48] sm:$0xff] %vm790, %v787
          %793 = vrot.lane.b32.xlu0 %v613, 80
          %v794 = vpop.permute.xlu0 %793
          %795 = vrot.lane.b32.xlu0 %v614, 80
          %v796 = vpop.permute.xlu0 %795
          %vm799 = vcmask 786048
          %800 = vst.msk [vmem:[#allocation3 + $0x50] sm:$0xff] %vm799, %v794
          %801 = vst.msk [vmem:[#allocation3 + $0x58] sm:$0xff] %vm799, %v796
          %802 = vrot.lane.b32.xlu0 %v613, 96
          %v803 = vpop.permute.xlu0 %802
          %804 = vrot.lane.b32.xlu0 %v614, 96
          %v805 = vpop.permute.xlu0 %804
          %vm808 = vcmask 917248
          %809 = vst.msk [vmem:[#allocation3 + $0x60] sm:$0xff] %vm808, %v803
          %810 = vst.msk [vmem:[#allocation3 + $0x68] sm:$0xff] %vm808, %v805
          %811 = vrot.lane.b32.xlu0 %v613, 112
          %v812 = vpop.permute.xlu0 %811
          %813 = vrot.lane.b32.xlu0 %v614, 112
          %v814 = vpop.permute.xlu0 %813
          %vm817 = vcmask 1048448
          %818 = vst.msk [vmem:[#allocation3 + $0x70] sm:$0xff] %vm817, %v812
          %819 = vst.msk [vmem:[#allocation3 + $0x78] sm:$0xff] %vm817, %v814
        $region112: #{tpu_custom_call.1} parent=79 // pred_fallthru
          _
        %vm820 = vcmask 130048
        %v821 = vsel %vm820, %v613, 0.0
        %822 = vadd.xlane.f32.xlu0 %v821
        %v823 = vpop.xlane.xlu0 %822
        %v824 = vsel %vm820, %v614, 0.0
        %825 = vadd.xlane.f32.xlu0 %v824
        %v826 = vpop.xlane.xlu0 %825
        %v827 = vld [vmem:[%s534] sm:$0xff]
        %v828 = vpack.c.bf16 %v827, %v827
        %v829 = vld [vmem:[#allocation12] sm:$0xf]
        %v830 = vld [vmem:[#allocation12 + $0x4] sm:$0xf]
        %v831 = vld [vmem:[#allocation12 + $0x8] sm:$0xf]
        %v832 = vld [vmem:[#allocation12 + $0xc] sm:$0xf]
        %v833 = vld [vmem:[#allocation12 + $0x10] sm:$0xf]
        %v834 = vld [vmem:[#allocation12 + $0x14] sm:$0xf]
        %v835 = vld [vmem:[#allocation12 + $0x18] sm:$0xf]
        %v836 = vld [vmem:[#allocation12 + $0x1c] sm:$0xf]
        %v837 = vld [vmem:[%s4] sm:$0x1]
        %v839 = vperm.slane %v837, 0
        %v849 = vunpack.c.l.b16 %v829
        %v850 = vunpack.c.l.b16 %v830
        %v851 = vunpack.c.l.b16 %v831
        %v852 = vunpack.c.l.b16 %v832
        %v853 = vunpack.c.l.b16 %v833
        %v854 = vunpack.c.l.b16 %v834
        %v855 = vunpack.c.l.b16 %v835
        %v856 = vunpack.c.l.b16 %v836
        %v857 = vpack.c.b16 %v850, %v849
        %v858 = vpack.c.b16 %v852, %v851
        %v859 = vpack.c.b16 %v854, %v853
        %v860 = vpack.c.b16 %v856, %v855
        %vm865 = vcmask 523264
        %v867 = vsel %vm865, %v828, 0
        %869 = vmatpush.bf16.msra.mxu0 0
        %870 = vmatpush.bf16.msra.mxu0 0
        %871 = vmatpush.bf16.msra.mxu0 0
        %872 = vmatpush.bf16.msra.mxu0 0
        %873 = vmatpush.bf16.msra.mxu0 %v860
        %874 = vmatpush.bf16.msra.mxu0 %v859
        %875 = vmatpush.bf16.msra.mxu0 %v858
        %876 = vmatpush.bf16.msra.mxu0 %v857
        %877 = vmatmul.bf16.gmra.mxu0 %v867
        %v878 = vpop.f32.mrf.mxu0
        %v879 = vadd.f32 %v839, %v878
        %v880 = vpop.f32.mrf.mxu0
        %881 = vdwg.mxu0
        %v882 = vpack.c.bf16 %v879, %v879
        %v883 = vld [vmem:[#allocation15] sm:$0xf]
        %v884 = vld [vmem:[#allocation15 + $0x4] sm:$0xf]
        %v885 = vld [vmem:[#allocation15 + $0x8] sm:$0xf]
        %v886 = vld [vmem:[#allocation15 + $0xc] sm:$0xf]
        %v887 = vld [vmem:[#allocation15 + $0x10] sm:$0xf]
        %v888 = vld [vmem:[#allocation15 + $0x14] sm:$0xf]
        %v889 = vld [vmem:[#allocation15 + $0x18] sm:$0xf]
        %v890 = vld [vmem:[#allocation15 + $0x1c] sm:$0xf]
        %v899 = vunpack.c.l.b16 %v883
        %v900 = vunpack.c.l.b16 %v884
        %v901 = vunpack.c.l.b16 %v885
        %v902 = vunpack.c.l.b16 %v886
        %v903 = vunpack.c.l.b16 %v887
        %v904 = vunpack.c.l.b16 %v888
        %v905 = vunpack.c.l.b16 %v889
        %v906 = vunpack.c.l.b16 %v890
        %v907 = vpack.c.b16 %v900, %v899
        %v908 = vpack.c.b16 %v902, %v901
        %v909 = vpack.c.b16 %v904, %v903
        %v910 = vpack.c.b16 %v906, %v905
        %v916 = vsel %vm865, %v882, 0
        %918 = vmatpush.bf16.msra.mxu0 0
        %919 = vmatpush.bf16.msra.mxu0 0
        %920 = vmatpush.bf16.msra.mxu0 0
        %921 = vmatpush.bf16.msra.mxu0 0
        %922 = vmatpush.bf16.msra.mxu0 %v910
        %923 = vmatpush.bf16.msra.mxu0 %v909
        %924 = vmatpush.bf16.msra.mxu0 %v908
        %925 = vmatpush.bf16.msra.mxu0 %v907
        %926 = vmatmul.bf16.gmra.mxu0 %v916
        %v927 = vpop.f32.mrf.mxu0
        %v928 = vadd.f32 0.0, %v927
        %v929 = vpop.f32.mrf.mxu0
        %930 = vdwg.mxu0
        %v931 = vld [vmem:[#allocation2] sm:$0xff]
        %v932 = vld [vmem:[#allocation2 + $0x8] sm:$0xff]
        %v933 = vperm.slane %v928, 0
        %v934 = vmul.f32 %v823, %v933
        %v935 = vmul.f32 %v826, %v933
        %v936 = vadd.f32 %v934, %v931
        %v937 = vadd.f32 %v935, %v932
        %v938 = vmax.f32 %v936, 0.0
        %v939 = vmax.f32 %v937, 0.0
        %940 = vst [vmem:[#allocation4] sm:$0xff] %v938
        %941 = vst [vmem:[#allocation4 + $0x8] sm:$0xff] %v939
        %v942 = vperm.slane %v928, 1
        %v943 = vmul.f32 %v823, %v942
        %v944 = vmul.f32 %v826, %v942
        %v945 = vadd.f32 %v943, %v931
        %v946 = vadd.f32 %v944, %v932
        %v947 = vmax.f32 %v945, 0.0
        %v948 = vmax.f32 %v946, 0.0
        %949 = vst [vmem:[#allocation4 + $0x10] sm:$0xff] %v947
        %950 = vst [vmem:[#allocation4 + $0x18] sm:$0xff] %v948
        %v951 = vperm.slane %v928, 2
        %v952 = vmul.f32 %v823, %v951
        %v953 = vmul.f32 %v826, %v951
        %v954 = vadd.f32 %v952, %v931
        %v955 = vadd.f32 %v953, %v932
        %v956 = vmax.f32 %v954, 0.0
        %v957 = vmax.f32 %v955, 0.0
        %958 = vst [vmem:[#allocation4 + $0x20] sm:$0xff] %v956
        %959 = vst [vmem:[#allocation4 + $0x28] sm:$0xff] %v957
        %v960 = vperm.slane %v928, 3
        %v961 = vmul.f32 %v823, %v960
        %v962 = vmul.f32 %v826, %v960
        %v963 = vadd.f32 %v961, %v931
        %v964 = vadd.f32 %v962, %v932
        %v965 = vmax.f32 %v963, 0.0
        %v966 = vmax.f32 %v964, 0.0
        %967 = vst [vmem:[#allocation4 + $0x30] sm:$0xff] %v965
        %968 = vst [vmem:[#allocation4 + $0x38] sm:$0xff] %v966
        %v969 = vperm.slane %v928, 4
        %v970 = vmul.f32 %v823, %v969
        %v971 = vmul.f32 %v826, %v969
        %v972 = vadd.f32 %v970, %v931
        %v973 = vadd.f32 %v971, %v932
        %v974 = vmax.f32 %v972, 0.0
        %v975 = vmax.f32 %v973, 0.0
        %976 = vst [vmem:[#allocation4 + $0x40] sm:$0xff] %v974
        %977 = vst [vmem:[#allocation4 + $0x48] sm:$0xff] %v975
        %v978 = vperm.slane %v928, 5
        %v979 = vmul.f32 %v823, %v978
        %v980 = vmul.f32 %v826, %v978
        %v981 = vadd.f32 %v979, %v931
        %v982 = vadd.f32 %v980, %v932
        %v983 = vmax.f32 %v981, 0.0
        %v984 = vmax.f32 %v982, 0.0
        %985 = vst [vmem:[#allocation4 + $0x50] sm:$0xff] %v983
        %986 = vst [vmem:[#allocation4 + $0x58] sm:$0xff] %v984
        %v987 = vperm.slane %v928, 6
        %v988 = vmul.f32 %v823, %v987
        %v989 = vmul.f32 %v826, %v987
        %v990 = vadd.f32 %v988, %v931
        %v991 = vadd.f32 %v989, %v932
        %v992 = vmax.f32 %v990, 0.0
        %v993 = vmax.f32 %v991, 0.0
        %994 = vst [vmem:[#allocation4 + $0x60] sm:$0xff] %v992
        %995 = vst [vmem:[#allocation4 + $0x68] sm:$0xff] %v993
        %v996 = vperm.slane %v928, 7
        %v997 = vmul.f32 %v823, %v996
        %v998 = vmul.f32 %v826, %v996
        %v999 = vadd.f32 %v997, %v931
        %v1000 = vadd.f32 %v998, %v932
        %v1001 = vmax.f32 %v999, 0.0
        %v1002 = vmax.f32 %v1000, 0.0
        %1003 = vst [vmem:[#allocation4 + $0x70] sm:$0xff] %v1001
        %1004 = vst [vmem:[#allocation4 + $0x78] sm:$0xff] %v1002
        %v1005 = vld [vmem:[#allocation4] sm:$0xff]
        %v1006 = vld [vmem:[#allocation4 + $0x8] sm:$0xff]
        %v1007 = vld [vmem:[#allocation4 + $0x10] sm:$0xff]
        %v1008 = vld [vmem:[#allocation4 + $0x18] sm:$0xff]
        %v1009 = vld [vmem:[#allocation4 + $0x20] sm:$0xff]
        %v1010 = vld [vmem:[#allocation4 + $0x28] sm:$0xff]
        %v1011 = vld [vmem:[#allocation4 + $0x30] sm:$0xff]
        %v1012 = vld [vmem:[#allocation4 + $0x38] sm:$0xff]
        %v1013 = vld [vmem:[#allocation4 + $0x40] sm:$0xff]
        %v1014 = vld [vmem:[#allocation4 + $0x48] sm:$0xff]
        %v1015 = vld [vmem:[#allocation4 + $0x50] sm:$0xff]
        %v1016 = vld [vmem:[#allocation4 + $0x58] sm:$0xff]
        %v1017 = vld [vmem:[#allocation4 + $0x60] sm:$0xff]
        %v1018 = vld [vmem:[#allocation4 + $0x68] sm:$0xff]
        %v1019 = vld [vmem:[#allocation4 + $0x70] sm:$0xff]
        %v1020 = vld [vmem:[#allocation4 + $0x78] sm:$0xff]
        %v1021 = vpack.c.bf16 %v1006, %v1005
        %v1022 = vpack.c.bf16 %v1008, %v1007
        %v1023 = vpack.c.bf16 %v1010, %v1009
        %v1024 = vpack.c.bf16 %v1012, %v1011
        %v1025 = vpack.c.bf16 %v1014, %v1013
        %v1026 = vpack.c.bf16 %v1016, %v1015
        %v1027 = vpack.c.bf16 %v1018, %v1017
        %v1028 = vpack.c.bf16 %v1020, %v1019
        %v1029 = vld [vmem:[#allocation17] sm:$0xf]
        %v1030 = vld [vmem:[#allocation17 + $0x4] sm:$0xf]
        %v1031 = vld [vmem:[#allocation17 + $0x8] sm:$0xf]
        %v1032 = vld [vmem:[#allocation17 + $0xc] sm:$0xf]
        %v1033 = vld [vmem:[#allocation17 + $0x10] sm:$0xf]
        %v1034 = vld [vmem:[#allocation17 + $0x14] sm:$0xf]
        %v1035 = vld [vmem:[#allocation17 + $0x18] sm:$0xf]
        %v1036 = vld [vmem:[#allocation17 + $0x1c] sm:$0xf]
        %v1037 = vld [vmem:[#allocation17 + $0x20] sm:$0xf]
        %v1038 = vld [vmem:[#allocation17 + $0x24] sm:$0xf]
        %v1039 = vld [vmem:[#allocation17 + $0x28] sm:$0xf]
        %v1040 = vld [vmem:[#allocation17 + $0x2c] sm:$0xf]
        %v1041 = vld [vmem:[#allocation17 + $0x30] sm:$0xf]
        %v1042 = vld [vmem:[#allocation17 + $0x34] sm:$0xf]
        %v1043 = vld [vmem:[#allocation17 + $0x38] sm:$0xf]
        %v1044 = vld [vmem:[#allocation17 + $0x3c] sm:$0xf]
        %v1061 = vunpack.c.l.b16 %v1029
        %v1062 = vunpack.c.l.b16 %v1030
        %v1063 = vunpack.c.l.b16 %v1031
        %v1064 = vunpack.c.l.b16 %v1032
        %v1065 = vunpack.c.l.b16 %v1033
        %v1066 = vunpack.c.l.b16 %v1034
        %v1067 = vunpack.c.l.b16 %v1035
        %v1068 = vunpack.c.l.b16 %v1036
        %v1069 = vunpack.c.l.b16 %v1037
        %v1070 = vunpack.c.l.b16 %v1038
        %v1071 = vunpack.c.l.b16 %v1039
        %v1072 = vunpack.c.l.b16 %v1040
        %v1073 = vunpack.c.l.b16 %v1041
        %v1074 = vunpack.c.l.b16 %v1042
        %v1075 = vunpack.c.l.b16 %v1043
        %v1076 = vunpack.c.l.b16 %v1044
        %v1077 = vpack.c.b16 %v1062, %v1061
        %v1078 = vpack.c.b16 %v1064, %v1063
        %v1079 = vpack.c.b16 %v1066, %v1065
        %v1080 = vpack.c.b16 %v1068, %v1067
        %v1081 = vpack.c.b16 %v1070, %v1069
        %v1082 = vpack.c.b16 %v1072, %v1071
        %v1083 = vpack.c.b16 %v1074, %v1073
        %v1084 = vpack.c.b16 %v1076, %v1075
        %1093 = vmatpush.bf16.msra.mxu0 %v1084
        %1094 = vmatpush.bf16.msra.mxu0 %v1083
        %1095 = vmatpush.bf16.msra.mxu0 %v1082
        %1096 = vmatpush.bf16.msra.mxu0 %v1081
        %1097 = vmatpush.bf16.msra.mxu0 %v1080
        %1098 = vmatpush.bf16.msra.mxu0 %v1079
        %1099 = vmatpush.bf16.msra.mxu0 %v1078
        %1100 = vmatpush.bf16.msra.mxu0 %v1077
        %1101 = vmatmul.bf16.gmra.mxu0 %v1021
        %v1102 = vpop.f32.mrf.mxu0
        %v1103 = vadd.f32 0.0, %v1102
        %v1104 = vpop.f32.mrf.mxu0
        %v1105 = vadd.f32 0.0, %v1104
        %1106 = vmatmul.bf16.gmra.mxu0 %v1022
        %v1107 = vpop.f32.mrf.mxu0
        %v1108 = vadd.f32 0.0, %v1107
        %v1109 = vpop.f32.mrf.mxu0
        %v1110 = vadd.f32 0.0, %v1109
        %1111 = vmatmul.bf16.gmra.mxu0 %v1023
        %v1112 = vpop.f32.mrf.mxu0
        %v1113 = vadd.f32 0.0, %v1112
        %v1114 = vpop.f32.mrf.mxu0
        %v1115 = vadd.f32 0.0, %v1114
        %1116 = vmatmul.bf16.gmra.mxu0 %v1024
        %v1117 = vpop.f32.mrf.mxu0
        %v1118 = vadd.f32 0.0, %v1117
        %v1119 = vpop.f32.mrf.mxu0
        %v1120 = vadd.f32 0.0, %v1119
        %1121 = vmatmul.bf16.gmra.mxu0 %v1025
        %v1122 = vpop.f32.mrf.mxu0
        %v1123 = vadd.f32 0.0, %v1122
        %v1124 = vpop.f32.mrf.mxu0
        %v1125 = vadd.f32 0.0, %v1124
        %1126 = vmatmul.bf16.gmra.mxu0 %v1026
        %v1127 = vpop.f32.mrf.mxu0
        %v1128 = vadd.f32 0.0, %v1127
        %v1129 = vpop.f32.mrf.mxu0
        %v1130 = vadd.f32 0.0, %v1129
        %1131 = vmatmul.bf16.gmra.mxu0 %v1027
        %v1132 = vpop.f32.mrf.mxu0
        %v1133 = vadd.f32 0.0, %v1132
        %v1134 = vpop.f32.mrf.mxu0
        %v1135 = vadd.f32 0.0, %v1134
        %1136 = vmatmul.bf16.gmra.mxu0 %v1028
        %v1137 = vpop.f32.mrf.mxu0
        %v1138 = vadd.f32 0.0, %v1137
        %v1139 = vpop.f32.mrf.mxu0
        %v1140 = vadd.f32 0.0, %v1139
        %1141 = vdwg.mxu0
        %v1142 = vld [vmem:[#allocation3] sm:$0xff]
        %v1143 = vld [vmem:[#allocation3 + $0x8] sm:$0xff]
        %v1144 = vld [vmem:[#allocation3 + $0x10] sm:$0xff]
        %v1145 = vld [vmem:[#allocation3 + $0x18] sm:$0xff]
        %v1146 = vld [vmem:[#allocation3 + $0x20] sm:$0xff]
        %v1147 = vld [vmem:[#allocation3 + $0x28] sm:$0xff]
        %v1148 = vld [vmem:[#allocation3 + $0x30] sm:$0xff]
        %v1149 = vld [vmem:[#allocation3 + $0x38] sm:$0xff]
        %v1150 = vld [vmem:[#allocation3 + $0x40] sm:$0xff]
        %v1151 = vld [vmem:[#allocation3 + $0x48] sm:$0xff]
        %v1152 = vld [vmem:[#allocation3 + $0x50] sm:$0xff]
        %v1153 = vld [vmem:[#allocation3 + $0x58] sm:$0xff]
        %v1154 = vld [vmem:[#allocation3 + $0x60] sm:$0xff]
        %v1155 = vld [vmem:[#allocation3 + $0x68] sm:$0xff]
        %v1156 = vld [vmem:[#allocation3 + $0x70] sm:$0xff]
        %v1157 = vld [vmem:[#allocation3 + $0x78] sm:$0xff]
        %v1158 = vpack.c.bf16 %v1143, %v1142
        %v1159 = vpack.c.bf16 %v1145, %v1144
        %v1160 = vpack.c.bf16 %v1147, %v1146
        %v1161 = vpack.c.bf16 %v1149, %v1148
        %v1162 = vpack.c.bf16 %v1151, %v1150
        %v1163 = vpack.c.bf16 %v1153, %v1152
        %v1164 = vpack.c.bf16 %v1155, %v1154
        %v1165 = vpack.c.bf16 %v1157, %v1156
        %v1166 = vpack.c.bf16 %v1105, %v1103
        %v1167 = vpack.c.bf16 %v1110, %v1108
        %v1168 = vpack.c.bf16 %v1115, %v1113
        %v1169 = vpack.c.bf16 %v1120, %v1118
        %v1170 = vpack.c.bf16 %v1125, %v1123
        %v1171 = vpack.c.bf16 %v1130, %v1128
        %v1172 = vpack.c.bf16 %v1135, %v1133
        %v1173 = vpack.c.bf16 %v1140, %v1138
        %v1174 = vld [vmem:[%s10] sm:$0x1]
        %v1176 = vperm.slane %v1174, 0
        %1178 = vmatpush.bf16.msra.mxu0 %v1173
        %1179 = vmatpush.bf16.msra.mxu0 %v1172
        %1180 = vmatpush.bf16.msra.mxu0 %v1171
        %1181 = vmatpush.bf16.msra.mxu0 %v1170
        %1182 = vmatpush.bf16.msra.mxu0 %v1169
        %1183 = vmatpush.bf16.msra.mxu0 %v1168
        %1184 = vmatpush.bf16.msra.mxu0 %v1167
        %1185 = vmatpush.bf16.msra.mxu0 %v1166
        %1186 = vmatmul.bf16.gmra.mxu0 %v1158
        %v1187 = vpop.f32.mrf.mxu0
        %v1188 = vadd.f32 %v1176, %v1187
        %v1189 = vpop.f32.mrf.mxu0
        %v1190 = vadd.f32 %v1176, %v1189
        %1191 = vmatmul.bf16.gmra.mxu0 %v1159
        %v1192 = vpop.f32.mrf.mxu0
        %v1193 = vadd.f32 %v1176, %v1192
        %v1194 = vpop.f32.mrf.mxu0
        %v1195 = vadd.f32 %v1176, %v1194
        %1196 = vmatmul.bf16.gmra.mxu0 %v1160
        %v1197 = vpop.f32.mrf.mxu0
        %v1198 = vadd.f32 %v1176, %v1197
        %v1199 = vpop.f32.mrf.mxu0
        %v1200 = vadd.f32 %v1176, %v1199
        %1201 = vmatmul.bf16.gmra.mxu0 %v1161
        %v1202 = vpop.f32.mrf.mxu0
        %v1203 = vadd.f32 %v1176, %v1202
        %v1204 = vpop.f32.mrf.mxu0
        %v1205 = vadd.f32 %v1176, %v1204
        %1206 = vmatmul.bf16.gmra.mxu0 %v1162
        %v1207 = vpop.f32.mrf.mxu0
        %v1208 = vadd.f32 %v1176, %v1207
        %v1209 = vpop.f32.mrf.mxu0
        %v1210 = vadd.f32 %v1176, %v1209
        %1211 = vmatmul.bf16.gmra.mxu0 %v1163
        %v1212 = vpop.f32.mrf.mxu0
        %v1213 = vadd.f32 %v1176, %v1212
        %v1214 = vpop.f32.mrf.mxu0
        %v1215 = vadd.f32 %v1176, %v1214
        %1216 = vmatmul.bf16.gmra.mxu0 %v1164
        %v1217 = vpop.f32.mrf.mxu0
        %v1218 = vadd.f32 %v1176, %v1217
        %v1219 = vpop.f32.mrf.mxu0
        %v1220 = vadd.f32 %v1176, %v1219
        %1221 = vmatmul.bf16.gmra.mxu0 %v1165
        %v1222 = vpop.f32.mrf.mxu0
        %v1223 = vadd.f32 %v1176, %v1222
        %v1224 = vpop.f32.mrf.mxu0
        %v1225 = vadd.f32 %v1176, %v1224
        %1226 = vdwg.mxu0
        %v1227 = vmax.f32 %v1188, 0.0
        %v1228 = vmax.f32 %v1190, 0.0
        %v1229 = vmax.f32 %v1193, 0.0
        %v1230 = vmax.f32 %v1195, 0.0
        %v1231 = vmax.f32 %v1198, 0.0
        %v1232 = vmax.f32 %v1200, 0.0
        %v1233 = vmax.f32 %v1203, 0.0
        %v1234 = vmax.f32 %v1205, 0.0
        %v1235 = vmax.f32 %v1208, 0.0
        %v1236 = vmax.f32 %v1210, 0.0
        %v1237 = vmax.f32 %v1213, 0.0
        %v1238 = vmax.f32 %v1215, 0.0
        %v1239 = vmax.f32 %v1218, 0.0
        %v1240 = vmax.f32 %v1220, 0.0
        %v1241 = vmax.f32 %v1223, 0.0
        %v1242 = vmax.f32 %v1225, 0.0
        %v1243 = vld [vmem:[%s11] sm:$0x1]
        %v1245 = vperm.slane %v1243, 0
        %v1247 = vmul.f32 %v1227, %v1245
        %v1248 = vmul.f32 %v1228, %v1245
        %v1249 = vmul.f32 %v1229, %v1245
        %v1250 = vmul.f32 %v1230, %v1245
        %v1251 = vmul.f32 %v1231, %v1245
        %v1252 = vmul.f32 %v1232, %v1245
        %v1253 = vmul.f32 %v1233, %v1245
        %v1254 = vmul.f32 %v1234, %v1245
        %v1255 = vmul.f32 %v1235, %v1245
        %v1256 = vmul.f32 %v1236, %v1245
        %v1257 = vmul.f32 %v1237, %v1245
        %v1258 = vmul.f32 %v1238, %v1245
        %v1259 = vmul.f32 %v1239, %v1245
        %v1260 = vmul.f32 %v1240, %v1245
        %v1261 = vmul.f32 %v1241, %v1245
        %v1262 = vmul.f32 %v1242, %v1245
        %1263 = vadd.xlane.f32.xlu0 %v1247
        %v1264 = vpop.xlane.xlu0 %1263
        %1265 = vadd.xlane.f32.xlu0 %v1248
        %v1266 = vpop.xlane.xlu0 %1265
        %1267 = vadd.xlane.f32.xlu0 %v1249
        %v1268 = vpop.xlane.xlu0 %1267
        %1269 = vadd.xlane.f32.xlu0 %v1250
        %v1270 = vpop.xlane.xlu0 %1269
        %1271 = vadd.xlane.f32.xlu0 %v1251
        %v1272 = vpop.xlane.xlu0 %1271
        %1273 = vadd.xlane.f32.xlu0 %v1252
        %v1274 = vpop.xlane.xlu0 %1273
        %1275 = vadd.xlane.f32.xlu0 %v1253
        %v1276 = vpop.xlane.xlu0 %1275
        %1277 = vadd.xlane.f32.xlu0 %v1254
        %v1278 = vpop.xlane.xlu0 %1277
        %1279 = vadd.xlane.f32.xlu0 %v1255
        %v1280 = vpop.xlane.xlu0 %1279
        %1281 = vadd.xlane.f32.xlu0 %v1256
        %v1282 = vpop.xlane.xlu0 %1281
        %1283 = vadd.xlane.f32.xlu0 %v1257
        %v1284 = vpop.xlane.xlu0 %1283
        %1285 = vadd.xlane.f32.xlu0 %v1258
        %v1286 = vpop.xlane.xlu0 %1285
        %1287 = vadd.xlane.f32.xlu0 %v1259
        %v1288 = vpop.xlane.xlu0 %1287
        %1289 = vadd.xlane.f32.xlu0 %v1260
        %v1290 = vpop.xlane.xlu0 %1289
        %1291 = vadd.xlane.f32.xlu0 %v1261
        %v1292 = vpop.xlane.xlu0 %1291
        %1293 = vadd.xlane.f32.xlu0 %v1262
        %v1294 = vpop.xlane.xlu0 %1293
        %vm1295 = vcmask 7168
        %v1296 = vsel %vm1295, %v1264, %v1268
        %v1297 = vsel %vm1295, %v1266, %v1270
        %vm1298 = vcmask 15360
        %v1299 = vsel %vm1298, %v1296, %v1272
        %v1300 = vsel %vm1298, %v1297, %v1274
        %vm1301 = vcmask 23552
        %v1302 = vsel %vm1301, %v1299, %v1276
        %v1303 = vsel %vm1301, %v1300, %v1278
        %vm1304 = vcmask 31744
        %v1305 = vsel %vm1304, %v1302, %v1280
        %v1306 = vsel %vm1304, %v1303, %v1282
        %vm1307 = vcmask 39936
        %v1308 = vsel %vm1307, %v1305, %v1284
        %v1309 = vsel %vm1307, %v1306, %v1286
        %vm1310 = vcmask 48128
        %v1311 = vsel %vm1310, %v1308, %v1288
        %v1312 = vsel %vm1310, %v1309, %v1290
        %vm1313 = vcmask 56320
        %v1314 = vsel %vm1313, %v1311, %v1292
        %v1315 = vsel %vm1313, %v1312, %v1294
        %s1316 = sld [smem:[#allocation5]]
        %v1317 = vpack.c.bf16 %v1315, %v1314
        %v1318 = vstv %s1316
        %v1320 = vsel %vm820, %v615, 0
        %1322 = vmatpush.bf16.msra.mxu0 0
        %1323 = vmatpush.bf16.msra.mxu0 0
        %1324 = vmatpush.bf16.msra.mxu0 0
        %1325 = vmatpush.bf16.msra.mxu0 0
        %1326 = vmatpush.bf16.msra.mxu0 0
        %1327 = vmatpush.bf16.msra.mxu0 0
        %1328 = vmatpush.bf16.msra.mxu0 0
        %1329 = vmatpush.bf16.msra.mxu0 %v1317
        %1330 = vmatmul.bf16.gmra.mxu0 %v1320
        %v1331 = vpop.f32.mrf.mxu0
        %v1332 = vadd.f32 %v1318, %v1331
        %v1333 = vpop.f32.mrf.mxu0
        %v1334 = vadd.f32 %v1318, %v1333
        %1335 = vdwg.mxu0
        %v1336 = vmax.f32 %v1332, 0.0
        %v1337 = vmax.f32 %v1334, 0.0
        %v1338 = vld [vmem:[%s13] sm:$0xf]
        %v1339 = vld [vmem:[%s13 + $0x4] sm:$0xf]
        %v1340 = vunpack.c.l.bf16 %v1338
        %v1341 = vunpack.c.l.bf16 %v1339
        %v1342 = vld [vmem:[%s14] sm:$0x1]
        %1344 = vset.pattern.permute.xlu0 0
        %1345 = vperm.xlu0 %1344, %v1336
        %v1346 = vpop.permute.xlu0 %1345
        %1349 = vset.pattern.permute.xlu0 0
        %1350 = vperm.xlu0 %1349, %v1337
        %v1351 = vpop.permute.xlu0 %1350
        %v1353 = vmul.f32 %v1346, %v1340
        %v1354 = vmul.f32 %v1351, %v1341
        %v1355 = vsel %vm865, %v1353, 0.0
        %v1356 = vsel %vm865, %v1354, 0.0
        %v1357 = vadd.f32 %v1355, %v1356
        %v1358 = vrot.slane %v1357, 4
        %v1359 = vadd.f32 %v1357, %v1358
        %v1360 = vrot.slane %v1359, 2
        %v1361 = vadd.f32 %v1359, %v1360
        %v1362 = vrot.slane %v1361, 1
        %v1363 = vadd.f32 %v1361, %v1362
        %v1364 = vadd.f32 %v1363, %v1342
        %1365 = vset.pattern.permute.xlu0 1
        %1366 = vperm.xlu0 %1365, %v1336
        %v1367 = vpop.permute.xlu0 %1366
        %1369 = vset.pattern.permute.xlu0 1
        %1370 = vperm.xlu0 %1369, %v1337
        %v1371 = vpop.permute.xlu0 %1370
        %v1373 = vmul.f32 %v1367, %v1340
        %v1374 = vmul.f32 %v1371, %v1341
        %v1375 = vsel %vm865, %v1373, 0.0
        %v1376 = vsel %vm865, %v1374, 0.0
        %v1377 = vadd.f32 %v1375, %v1376
        %v1378 = vrot.slane %v1377, 4
        %v1379 = vadd.f32 %v1377, %v1378
        %v1380 = vrot.slane %v1379, 2
        %v1381 = vadd.f32 %v1379, %v1380
        %v1382 = vrot.slane %v1381, 1
        %v1383 = vadd.f32 %v1381, %v1382
        %v1384 = vadd.f32 %v1383, %v1342
        %1385 = vset.pattern.permute.xlu0 2
        %1386 = vperm.xlu0 %1385, %v1336
        %v1387 = vpop.permute.xlu0 %1386
        %1389 = vset.pattern.permute.xlu0 2
        %1390 = vperm.xlu0 %1389, %v1337
        %v1391 = vpop.permute.xlu0 %1390
        %v1393 = vmul.f32 %v1387, %v1340
        %v1394 = vmul.f32 %v1391, %v1341
        %v1395 = vsel %vm865, %v1393, 0.0
        %v1396 = vsel %vm865, %v1394, 0.0
        %v1397 = vadd.f32 %v1395, %v1396
        %v1398 = vrot.slane %v1397, 4
        %v1399 = vadd.f32 %v1397, %v1398
        %v1400 = vrot.slane %v1399, 2
        %v1401 = vadd.f32 %v1399, %v1400
        %v1402 = vrot.slane %v1401, 1
        %v1403 = vadd.f32 %v1401, %v1402
        %v1404 = vadd.f32 %v1403, %v1342
        %1405 = vset.pattern.permute.xlu0 3
        %1406 = vperm.xlu0 %1405, %v1336
        %v1407 = vpop.permute.xlu0 %1406
        %1409 = vset.pattern.permute.xlu0 3
        %1410 = vperm.xlu0 %1409, %v1337
        %v1411 = vpop.permute.xlu0 %1410
        %v1413 = vmul.f32 %v1407, %v1340
        %v1414 = vmul.f32 %v1411, %v1341
        %v1415 = vsel %vm865, %v1413, 0.0
        %v1416 = vsel %vm865, %v1414, 0.0
        %v1417 = vadd.f32 %v1415, %v1416
        %v1418 = vrot.slane %v1417, 4
        %v1419 = vadd.f32 %v1417, %v1418
        %v1420 = vrot.slane %v1419, 2
        %v1421 = vadd.f32 %v1419, %v1420
        %v1422 = vrot.slane %v1421, 1
        %v1423 = vadd.f32 %v1421, %v1422
        %v1424 = vadd.f32 %v1423, %v1342
        %1425 = vset.pattern.permute.xlu0 4
        %1426 = vperm.xlu0 %1425, %v1336
        %v1427 = vpop.permute.xlu0 %1426
        %1429 = vset.pattern.permute.xlu0 4
        %1430 = vperm.xlu0 %1429, %v1337
        %v1431 = vpop.permute.xlu0 %1430
        %v1433 = vmul.f32 %v1427, %v1340
        %v1434 = vmul.f32 %v1431, %v1341
        %v1435 = vsel %vm865, %v1433, 0.0
        %v1436 = vsel %vm865, %v1434, 0.0
        %v1437 = vadd.f32 %v1435, %v1436
        %v1438 = vrot.slane %v1437, 4
        %v1439 = vadd.f32 %v1437, %v1438
        %v1440 = vrot.slane %v1439, 2
        %v1441 = vadd.f32 %v1439, %v1440
        %v1442 = vrot.slane %v1441, 1
        %v1443 = vadd.f32 %v1441, %v1442
        %v1444 = vadd.f32 %v1443, %v1342
        %1445 = vset.pattern.permute.xlu0 5
        %1446 = vperm.xlu0 %1445, %v1336
        %v1447 = vpop.permute.xlu0 %1446
        %1449 = vset.pattern.permute.xlu0 5
        %1450 = vperm.xlu0 %1449, %v1337
        %v1451 = vpop.permute.xlu0 %1450
        %v1453 = vmul.f32 %v1447, %v1340
        %v1454 = vmul.f32 %v1451, %v1341
        %v1455 = vsel %vm865, %v1453, 0.0
        %v1456 = vsel %vm865, %v1454, 0.0
        %v1457 = vadd.f32 %v1455, %v1456
        %v1458 = vrot.slane %v1457, 4
        %v1459 = vadd.f32 %v1457, %v1458
        %v1460 = vrot.slane %v1459, 2
        %v1461 = vadd.f32 %v1459, %v1460
        %v1462 = vrot.slane %v1461, 1
        %v1463 = vadd.f32 %v1461, %v1462
        %v1464 = vadd.f32 %v1463, %v1342
        %1465 = vset.pattern.permute.xlu0 6
        %1466 = vperm.xlu0 %1465, %v1336
        %v1467 = vpop.permute.xlu0 %1466
        %1469 = vset.pattern.permute.xlu0 6
        %1470 = vperm.xlu0 %1469, %v1337
        %v1471 = vpop.permute.xlu0 %1470
        %v1473 = vmul.f32 %v1467, %v1340
        %v1474 = vmul.f32 %v1471, %v1341
        %v1475 = vsel %vm865, %v1473, 0.0
        %v1476 = vsel %vm865, %v1474, 0.0
        %v1477 = vadd.f32 %v1475, %v1476
        %v1478 = vrot.slane %v1477, 4
        %v1479 = vadd.f32 %v1477, %v1478
        %v1480 = vrot.slane %v1479, 2
        %v1481 = vadd.f32 %v1479, %v1480
        %v1482 = vrot.slane %v1481, 1
        %v1483 = vadd.f32 %v1481, %v1482
        %v1484 = vadd.f32 %v1483, %v1342
        %1485 = vset.pattern.permute.xlu0 7
        %1486 = vperm.xlu0 %1485, %v1336
        %v1487 = vpop.permute.xlu0 %1486
        %1489 = vset.pattern.permute.xlu0 7
        %1490 = vperm.xlu0 %1489, %v1337
        %v1491 = vpop.permute.xlu0 %1490
        %v1493 = vmul.f32 %v1487, %v1340
        %v1494 = vmul.f32 %v1491, %v1341
        %v1495 = vsel %vm865, %v1493, 0.0
        %v1496 = vsel %vm865, %v1494, 0.0
        %v1497 = vadd.f32 %v1495, %v1496
        %v1498 = vrot.slane %v1497, 4
        %v1499 = vadd.f32 %v1497, %v1498
        %v1500 = vrot.slane %v1499, 2
        %v1501 = vadd.f32 %v1499, %v1500
        %v1502 = vrot.slane %v1501, 1
        %v1503 = vadd.f32 %v1501, %v1502
        %v1504 = vadd.f32 %v1503, %v1342
        %v1506 = vrot.slane %v1384, 7
        %v1509 = vrot.slane %v1404, 6
        %v1512 = vrot.slane %v1424, 5
        %v1515 = vrot.slane %v1444, 4
        %v1518 = vrot.slane %v1464, 3
        %v1521 = vrot.slane %v1484, 2
        %v1524 = vrot.slane %v1504, 1
        %vm1526 = vcmask 1040384
        %v1527 = vsel %vm1526, %v1364, %v1506
        %vm1528 = vcmask 1041408
        %v1529 = vsel %vm1528, %v1527, %v1509
        %vm1530 = vcmask 1042432
        %v1531 = vsel %vm1530, %v1529, %v1512
        %vm1532 = vcmask 1043456
        %v1533 = vsel %vm1532, %v1531, %v1515
        %vm1534 = vcmask 1044480
        %v1535 = vsel %vm1534, %v1533, %v1518
        %vm1536 = vcmask 1045504
        %v1537 = vsel %vm1536, %v1535, %v1521
        %vm1538 = vcmask 1046528
        %v1539 = vsel %vm1538, %v1537, %v1524
        %1540 = vst.msk [vmem:[%s611] sm:$0xff] %vm865, %v1539
        %s1541 = sand.u32 %s364, 1
        %s1542 = scalar_lea.sflag [#allocation8], %s1541
        %s1543 = sand.u32 %s364, 1
        %s1544 = smul.addr %s1543, 8
        %s1545 = scalar_lea.vmem [#allocation18], %s1544
        // Predicated region
        $region113: #{tpu_custom_call.1} parent=79 // pred_check
          %p1546 = pneg %p374
        $region114: #{tpu_custom_call.1} parent=79 // pred_check_branch
          %1548 = sbr.rel (%p1546) target = $region116
        $region115: #{tpu_custom_call.1} parent=79 // pred_region
          %1550 = vsyncadd %s1542, 0
          %s1551 = smul.addr %s36, 8
          %s1552 = scalar_lea.hbm %s15, %s1551
          %s1554 = sshll.u32 %s1545, 4
          %s1555 = int_to_ptr.vmem [resolvable:$true] %s1554
          %s1556 = sshll.u32 %s1552, 4
          %s1557 = int_to_ptr.hbm [resolvable:$true] %s1556
          %1559 = dma.vmem_to_hbm [thread:$0]  %s1555, 128, %s1557, %s1542
        $region116: #{tpu_custom_call.1} parent=79 // pred_fallthru
          _
      $region80: #{tpu_custom_call.1} parent=5 // pred_fallthru
        _
      %p1560 = scmp.le.s32.totalorder 2, %s31
      // Predicated region
      $region117: #{tpu_custom_call.1} parent=5 // pred_check
        %p1561 = pneg %p1560
      $region118: #{tpu_custom_call.1} parent=5 // pred_check_branch
        %1563 = sbr.rel (%p1561) target = $region120
      $region119: #{tpu_custom_call.1} parent=5 // pred_region
        %s1564 = ssub.s32 %s31, 2
        // Predicated region
        $region121: #{tpu_custom_call.1} parent=119 // pred_check
          %p1565 = pneg %p380
        $region122: #{tpu_custom_call.1} parent=119 // pred_check_branch
          %1567 = sbr.rel (%p1565) target = $region124
        $region123: #{tpu_custom_call.1} parent=119 // pred_region
          %s1568 = sand.u32 %s365, 1
          %s1569 = scalar_lea.sflag [#allocation8], %s1568
          %s1570 = sand.u32 %s365, 1
          %s1571 = smul.addr %s1570, 8
          %s1572 = scalar_lea.vmem [#allocation18], %s1571
          %1574 = dma.done %s1569, 128
        $region124: #{tpu_custom_call.1} parent=119 // pred_fallthru
          _
      $region120: #{tpu_custom_call.1} parent=5 // pred_fallthru
        _
    $region6: #{tpu_custom_call.1} parent=1 // loop_footer
      %s35 = sadd.s32 1, %s31
    $region7: #{tpu_custom_call.1} parent=1 // loop_footer_branch
      %30 = sbr.rel target = $region3
    $region8: #{tpu_custom_call.1} parent=1 // loop_exit
      _
    %1575 = vsyncpa [#allocation7], 1
    %s1576 = scalar_lea.sflag [#allocation7], 1
    %1577 = vsyncpa %s1576, 1
    %1578 = vsyncpa [#allocation10], 1
    %1579 = vsyncpa [#allocation13], 1
    %1580 = vsyncpa [#allocation16], 1
    %1581 = vsyncpa [#allocation8], 1
    %s1582 = scalar_lea.sflag [#allocation8], 1
    %1583 = vsyncpa %s1582, 1

</llo_original>
